<compile_context>
chip_gen: v6e
topology: v6e:2x2x1
jax: 0.10.0
libtpu: 0.0.40
codegen_flags: <defaults>
</compile_context>

<pallas_src>
import jax
import jax.numpy as jnp
from jax.experimental import pallas as pl
from jax.experimental.pallas import tpu as pltpu


def _conv3x3_kernel(x_ref, w_ref, b_ref, o_ref, col_ref):
    # x_ref:   (1, TILE_H+2, W+2, Cin)   bf16 halo'd input tile
    # w_ref:   (9*Cin, Cout)             bf16 im2col weight matrix
    # b_ref:   (1, Cout)                 f32 bias
    # o_ref:   (1, TILE_H, W, Cout)      f32 output tile
    # col_ref: (TILE_H, W, 9*Cin)        bf16 VMEM im2col scratch
    _, _, _, cin = x_ref.shape
    _, th, w, cout = o_ref.shape

    # Build the im2col patch matrix once per tile: 9 shift-copies, no
    # per-tap (H,W)-collapsing reshapes.
    for kh in range(3):
        for kw in range(3):
            tap = kh * 3 + kw
            col_ref[:, :, tap * cin:(tap + 1) * cin] = x_ref[0, kh:kh + th, kw:kw + w, :]

    # Single fused matmul on the MXU: K = 9*Cin, f32 accumulation.
    patches = col_ref[...].reshape(th * w, 9 * cin)          # contiguous collapse
    acc = jnp.dot(patches, w_ref[...], preferred_element_type=jnp.float32)
    acc = acc + b_ref[...]                                    # one f32 VPU pass

    o_ref[...] = acc.reshape(1, th, w, cout).astype(o_ref.dtype)


def _pick_tile_h(H, W, Cin, Cout, budget_bytes=16 * 1024 * 1024, max_tile_h=256):
    """Largest divisor of H whose per-step working set fits the VMEM budget."""
    def step_bytes(th):
        in_b = (th + 2) * (W + 2) * Cin * 2      # bf16 halo input tile
        col_b = th * W * 9 * Cin * 2             # bf16 im2col scratch
        out_b = th * W * Cout * 4                # f32 output tile
        return 2 * in_b + col_b + 2 * out_b      # in/out are double-buffered
    for th in range(min(H, max_tile_h), 0, -1):
        if H % th == 0 and step_bytes(th) <= budget_bytes:
            return th
    return 1


def conv3x3_pallas(x_nchw, weight_oihw, bias, use_refl=True, tile_h=None):
    """Equivalent of Conv3x3.forward. x_nchw: (N, Cin, H, W) -> (N, Cout, H, W)."""
    N, Cin, H, W = x_nchw.shape
    Cout = weight_oihw.shape[0]

    # ---- glue: layout + padding (outside the kernel hot path) ----
    x = jnp.transpose(x_nchw, (0, 2, 3, 1))                       # NCHW -> NHWC
    mode = "reflect" if use_refl else "constant"
    x_pad = jnp.pad(x, ((0, 0), (1, 1), (1, 1), (0, 0)), mode=mode)
    x_pad = x_pad.astype(jnp.bfloat16)                            # bf16 MXU operands

    if tile_h is None:
        tile_h = _pick_tile_h(H, W, Cin, Cout)
    assert H % tile_h == 0, "tile_h must divide H"
    n_tiles = H // tile_h

    # Overlapping halo row tiles: (N*n_tiles, TILE_H+2, W+2, Cin).
    x_tiles = jnp.stack(
        [x_pad[:, t * tile_h: t * tile_h + tile_h + 2] for t in range(n_tiles)],
        axis=1,
    ).reshape(N * n_tiles, tile_h + 2, W + 2, Cin)

    # im2col weights: (Cout, Cin, 3, 3) -> (3, 3, Cin, Cout) -> (9*Cin, Cout), bf16.
    w_mat = jnp.transpose(weight_oihw, (2, 3, 1, 0)).reshape(9 * Cin, Cout)
    w_mat = w_mat.astype(jnp.bfloat16)
    b = bias.reshape(1, Cout).astype(jnp.float32)

    grid_spec = pltpu.PrefetchScalarGridSpec(
        num_scalar_prefetch=0,
        grid=(N, n_tiles),
        in_specs=[
            pl.BlockSpec((1, tile_h + 2, W + 2, Cin),
                         lambda n, t: (n * n_tiles + t, 0, 0, 0)),
            pl.BlockSpec((9 * Cin, Cout), lambda n, t: (0, 0)),
            pl.BlockSpec((1, Cout), lambda n, t: (0, 0)),
        ],
        out_specs=pl.BlockSpec((1, tile_h, W, Cout),
                               lambda n, t: (n * n_tiles + t, 0, 0, 0)),
        scratch_shapes=[pltpu.VMEM((tile_h, W, 9 * Cin), jnp.bfloat16)],
    )

    out_tiles = pl.pallas_call(
        _conv3x3_kernel,
        out_shape=jax.ShapeDtypeStruct((N * n_tiles, tile_h, W, Cout), jnp.float32),
        grid_spec=grid_spec,
        compiler_params=pltpu.CompilerParams(
            dimension_semantics=("parallel", "parallel"),
            vmem_limit_bytes=48 * 1024 * 1024,   # safe under v7x's 64 MiB/TC
        ),
    )(x_tiles, w_mat, b)

    # (N*n_tiles, TILE_H, W, Cout) -> (N, H, W, Cout) -> NCHW
    out = out_tiles.reshape(N, H, W, Cout)
    return jnp.transpose(out, (0, 3, 1, 2)).astype(x_nchw.dtype)


if __name__ == "__main__":
    # Small deterministic example consistent with the module.
    N, Cin, Cout, H, W = 2, 4, 8, 16, 16
    key = jax.random.PRNGKey(0)
    k_x, k_w, k_b = jax.random.split(key, 3)

    x = jax.random.normal(k_x, (N, Cin, H, W), dtype=jnp.float32)
    # PyTorch Conv2d weight layout OIHW.
    weight = jax.random.normal(k_w, (Cout, Cin, 3, 3), dtype=jnp.float32) * 0.1
    bias = jax.random.normal(k_b, (Cout,), dtype=jnp.float32) * 0.1

    # tile_h=8 -> 2 spatial tiles per image, exercising the halo tiling path.
    out = conv3x3_pallas(x, weight, bias, use_refl=True, tile_h=8)
    out = jax.block_until_ready(out)

    # Reference: f32 XLA conv (reflection pad + VALID 3x3 + bias).
    x_pad = jnp.pad(x, ((0, 0), (0, 0), (1, 1), (1, 1)), mode="reflect")
    ref = jax.lax.conv_general_dilated(
        x_pad, weight, window_strides=(1, 1), padding="VALID",
        dimension_numbers=("NCHW", "OIHW", "NCHW"),
    ) + bias[None, :, None, None]

    assert out.shape == (N, Cout, H, W)
    # bf16 MXU operands -> loosened tolerance vs the f32 reference.
    max_err = float(jnp.max(jnp.abs(out - ref)))
    assert jnp.allclose(out, ref, atol=5e-2, rtol=5e-2), f"max_err={max_err}"

    print("KERNEL_OK")
</pallas_src>

<mosaic_0001>
module attributes {stable_mosaic.version = 11 : i64} {
  func.func @_conv3x3_kernel(%arg0: i32, %arg1: i32, %arg2: memref<1x10x18x4xbf16, #tpu.memory_space<vmem>>, %arg3: memref<36x8xbf16, #tpu.memory_space<vmem>>, %arg4: memref<1x8xf32, #tpu.memory_space<vmem>>, %arg5: memref<1x8x16x8xf32, #tpu.memory_space<vmem>>, %arg6: memref<8x16x36xbf16, #tpu.memory_space<vmem>>) attributes {dimension_semantics = [#tpu.dimension_semantics<parallel>, #tpu.dimension_semantics<parallel>], iteration_bounds = array<i64: 2, 2>, scalar_prefetch = 0 : i64, scratch_operands = 1 : i64, tpu.core_type = #tpu.core_type<tc>, window_params = [{transform_indices = @transform_0, window_bounds = array<i64: 1, 10, 18, 4>}, {pipeline_mode = #tpu.pipeline_mode<synchronous>, transform_indices = @transform_1, window_bounds = array<i64: 36, 8>}, {pipeline_mode = #tpu.pipeline_mode<synchronous>, transform_indices = @transform_2, window_bounds = array<i64: 1, 8>}, {transform_indices = @transform_3, window_bounds = array<i64: 1, 8, 16, 8>}]} {
    %c0 = arith.constant 0 : index
    %c0_0 = arith.constant 0 : index
    %c0_1 = arith.constant 0 : index
    %c0_2 = arith.constant 0 : index
    %0 = vector.load %arg2[%c0, %c0_0, %c0_1, %c0_2] : memref<1x10x18x4xbf16, #tpu.memory_space<vmem>>, vector<1x8x16x4xbf16>
    %1 = vector.shape_cast %0 : vector<1x8x16x4xbf16> to vector<8x16x4xbf16>
    %c0_3 = arith.constant 0 : index
    %c0_4 = arith.constant 0 : index
    %c0_5 = arith.constant 0 : index
    %2 = vector.load %arg6[%c0_3, %c0_4, %c0_5] : memref<8x16x36xbf16, #tpu.memory_space<vmem>>, vector<8x16x4xbf16>
    tpu.vector_store %arg6[%c0_3, %c0_4, %c0_5], %1 {strides = array<i32>} : memref<8x16x36xbf16, #tpu.memory_space<vmem>>, vector<8x16x4xbf16>,
    %c0_6 = arith.constant 0 : index
    %c0_7 = arith.constant 0 : index
    %c1 = arith.constant 1 : index
    %c0_8 = arith.constant 0 : index
    %3 = vector.load %arg2[%c0_6, %c0_7, %c1, %c0_8] : memref<1x10x18x4xbf16, #tpu.memory_space<vmem>>, vector<1x8x16x4xbf16>
    %4 = vector.shape_cast %3 : vector<1x8x16x4xbf16> to vector<8x16x4xbf16>
    %c0_9 = arith.constant 0 : index
    %c0_10 = arith.constant 0 : index
    %c4 = arith.constant 4 : index
    %5 = vector.load %arg6[%c0_9, %c0_10, %c4] : memref<8x16x36xbf16, #tpu.memory_space<vmem>>, vector<8x16x4xbf16>
    tpu.vector_store %arg6[%c0_9, %c0_10, %c4], %4 {strides = array<i32>} : memref<8x16x36xbf16, #tpu.memory_space<vmem>>, vector<8x16x4xbf16>,
    %c0_11 = arith.constant 0 : index
    %c0_12 = arith.constant 0 : index
    %c2 = arith.constant 2 : index
    %c0_13 = arith.constant 0 : index
    %6 = vector.load %arg2[%c0_11, %c0_12, %c2, %c0_13] : memref<1x10x18x4xbf16, #tpu.memory_space<vmem>>, vector<1x8x16x4xbf16>
    %7 = vector.shape_cast %6 : vector<1x8x16x4xbf16> to vector<8x16x4xbf16>
    %c0_14 = arith.constant 0 : index
    %c0_15 = arith.constant 0 : index
    %c8 = arith.constant 8 : index
    %8 = vector.load %arg6[%c0_14, %c0_15, %c8] : memref<8x16x36xbf16, #tpu.memory_space<vmem>>, vector<8x16x4xbf16>
    tpu.vector_store %arg6[%c0_14, %c0_15, %c8], %7 {strides = array<i32>} : memref<8x16x36xbf16, #tpu.memory_space<vmem>>, vector<8x16x4xbf16>,
    %c0_16 = arith.constant 0 : index
    %c1_17 = arith.constant 1 : index
    %c0_18 = arith.constant 0 : index
    %c0_19 = arith.constant 0 : index
    %9 = vector.load %arg2[%c0_16, %c1_17, %c0_18, %c0_19] : memref<1x10x18x4xbf16, #tpu.memory_space<vmem>>, vector<1x8x16x4xbf16>
    %10 = vector.shape_cast %9 : vector<1x8x16x4xbf16> to vector<8x16x4xbf16>
    %c0_20 = arith.constant 0 : index
    %c0_21 = arith.constant 0 : index
    %c12 = arith.constant 12 : index
    %11 = vector.load %arg6[%c0_20, %c0_21, %c12] : memref<8x16x36xbf16, #tpu.memory_space<vmem>>, vector<8x16x4xbf16>
    tpu.vector_store %arg6[%c0_20, %c0_21, %c12], %10 {strides = array<i32>} : memref<8x16x36xbf16, #tpu.memory_space<vmem>>, vector<8x16x4xbf16>,
    %c0_22 = arith.constant 0 : index
    %c1_23 = arith.constant 1 : index
    %c1_24 = arith.constant 1 : index
    %c0_25 = arith.constant 0 : index
    %12 = vector.load %arg2[%c0_22, %c1_23, %c1_24, %c0_25] : memref<1x10x18x4xbf16, #tpu.memory_space<vmem>>, vector<1x8x16x4xbf16>
    %13 = vector.shape_cast %12 : vector<1x8x16x4xbf16> to vector<8x16x4xbf16>
    %c0_26 = arith.constant 0 : index
    %c0_27 = arith.constant 0 : index
    %c16 = arith.constant 16 : index
    %14 = vector.load %arg6[%c0_26, %c0_27, %c16] : memref<8x16x36xbf16, #tpu.memory_space<vmem>>, vector<8x16x4xbf16>
    tpu.vector_store %arg6[%c0_26, %c0_27, %c16], %13 {strides = array<i32>} : memref<8x16x36xbf16, #tpu.memory_space<vmem>>, vector<8x16x4xbf16>,
    %c0_28 = arith.constant 0 : index
    %c1_29 = arith.constant 1 : index
    %c2_30 = arith.constant 2 : index
    %c0_31 = arith.constant 0 : index
    %15 = vector.load %arg2[%c0_28, %c1_29, %c2_30, %c0_31] : memref<1x10x18x4xbf16, #tpu.memory_space<vmem>>, vector<1x8x16x4xbf16>
    %16 = vector.shape_cast %15 : vector<1x8x16x4xbf16> to vector<8x16x4xbf16>
    %c0_32 = arith.constant 0 : index
    %c0_33 = arith.constant 0 : index
    %c20 = arith.constant 20 : index
    %17 = vector.load %arg6[%c0_32, %c0_33, %c20] : memref<8x16x36xbf16, #tpu.memory_space<vmem>>, vector<8x16x4xbf16>
    tpu.vector_store %arg6[%c0_32, %c0_33, %c20], %16 {strides = array<i32>} : memref<8x16x36xbf16, #tpu.memory_space<vmem>>, vector<8x16x4xbf16>,
    %c0_34 = arith.constant 0 : index
    %c2_35 = arith.constant 2 : index
    %c0_36 = arith.constant 0 : index
    %c0_37 = arith.constant 0 : index
    %18 = vector.load %arg2[%c0_34, %c2_35, %c0_36, %c0_37] : memref<1x10x18x4xbf16, #tpu.memory_space<vmem>>, vector<1x8x16x4xbf16>
    %19 = vector.shape_cast %18 : vector<1x8x16x4xbf16> to vector<8x16x4xbf16>
    %c0_38 = arith.constant 0 : index
    %c0_39 = arith.constant 0 : index
    %c24 = arith.constant 24 : index
    %20 = vector.load %arg6[%c0_38, %c0_39, %c24] : memref<8x16x36xbf16, #tpu.memory_space<vmem>>, vector<8x16x4xbf16>
    tpu.vector_store %arg6[%c0_38, %c0_39, %c24], %19 {strides = array<i32>} : memref<8x16x36xbf16, #tpu.memory_space<vmem>>, vector<8x16x4xbf16>,
    %c0_40 = arith.constant 0 : index
    %c2_41 = arith.constant 2 : index
    %c1_42 = arith.constant 1 : index
    %c0_43 = arith.constant 0 : index
    %21 = vector.load %arg2[%c0_40, %c2_41, %c1_42, %c0_43] : memref<1x10x18x4xbf16, #tpu.memory_space<vmem>>, vector<1x8x16x4xbf16>
    %22 = vector.shape_cast %21 : vector<1x8x16x4xbf16> to vector<8x16x4xbf16>
    %c0_44 = arith.constant 0 : index
    %c0_45 = arith.constant 0 : index
    %c28 = arith.constant 28 : index
    %23 = vector.load %arg6[%c0_44, %c0_45, %c28] : memref<8x16x36xbf16, #tpu.memory_space<vmem>>, vector<8x16x4xbf16>
    tpu.vector_store %arg6[%c0_44, %c0_45, %c28], %22 {strides = array<i32>} : memref<8x16x36xbf16, #tpu.memory_space<vmem>>, vector<8x16x4xbf16>,
    %c0_46 = arith.constant 0 : index
    %c2_47 = arith.constant 2 : index
    %c2_48 = arith.constant 2 : index
    %c0_49 = arith.constant 0 : index
    %24 = vector.load %arg2[%c0_46, %c2_47, %c2_48, %c0_49] : memref<1x10x18x4xbf16, #tpu.memory_space<vmem>>, vector<1x8x16x4xbf16>
    %25 = vector.shape_cast %24 : vector<1x8x16x4xbf16> to vector<8x16x4xbf16>
    %c0_50 = arith.constant 0 : index
    %c0_51 = arith.constant 0 : index
    %c32 = arith.constant 32 : index
    %26 = vector.load %arg6[%c0_50, %c0_51, %c32] : memref<8x16x36xbf16, #tpu.memory_space<vmem>>, vector<8x16x4xbf16>
    tpu.vector_store %arg6[%c0_50, %c0_51, %c32], %25 {strides = array<i32>} : memref<8x16x36xbf16, #tpu.memory_space<vmem>>, vector<8x16x4xbf16>,
    %c0_52 = arith.constant 0 : index
    %c0_53 = arith.constant 0 : index
    %c0_54 = arith.constant 0 : index
    %27 = vector.load %arg6[%c0_52, %c0_53, %c0_54] : memref<8x16x36xbf16, #tpu.memory_space<vmem>>, vector<8x16x36xbf16>
    %28 = vector.shape_cast %27 : vector<8x16x36xbf16> to vector<128x36xbf16>
    %c0_55 = arith.constant 0 : index
    %c0_56 = arith.constant 0 : index
    %29 = vector.load %arg3[%c0_55, %c0_56] : memref<36x8xbf16, #tpu.memory_space<vmem>>, vector<36x8xbf16>
    %cst = arith.constant dense<0.000000e+00> : vector<128x8xf32>
    %30 = tpu.matmul %28, %29, %cst {dimension_numbers = #tpu.dot_dimension_numbers<[1], [0], [0], [1], [0, 0, 1, 1], [], []>} : vector<128x36xbf16>, vector<36x8xbf16>, vector<128x8xf32> -> vector<128x8xf32>
    %c0_57 = arith.constant 0 : index
    %c0_58 = arith.constant 0 : index
    %31 = vector.load %arg4[%c0_57, %c0_58] : memref<1x8xf32, #tpu.memory_space<vmem>>, vector<1x8xf32>
    %32 = vector.broadcast %31 : vector<1x8xf32> to vector<128x8xf32>
    %33 = arith.addf %30, %32 : vector<128x8xf32>
    %34 = vector.shape_cast %33 : vector<128x8xf32> to vector<1x8x16x8xf32>
    %c0_59 = arith.constant 0 : index
    %c0_60 = arith.constant 0 : index
    %c0_61 = arith.constant 0 : index
    %c0_62 = arith.constant 0 : index
    %35 = vector.load %arg5[%c0_59, %c0_60, %c0_61, %c0_62] : memref<1x8x16x8xf32, #tpu.memory_space<vmem>>, vector<1x8x16x8xf32>
    tpu.vector_store %arg5[%c0_59, %c0_60, %c0_61, %c0_62], %34 {strides = array<i32>} : memref<1x8x16x8xf32, #tpu.memory_space<vmem>>, vector<1x8x16x8xf32>,
    return
  }
  func.func @transform_0(%arg0: i32, %arg1: i32) -> (i32, i32, i32, i32) {
    %c2_i32 = arith.constant 2 : i32
    %0 = arith.muli %arg0, %c2_i32 : i32
    %1 = arith.addi %0, %arg1 : i32
    %c0_i32 = arith.constant 0 : i32
    %c0_i32_0 = arith.constant 0 : i32
    %c0_i32_1 = arith.constant 0 : i32
    %c0_i32_2 = arith.constant 0 : i32
    return %1, %c0_i32, %c0_i32_0, %c0_i32_1 : i32, i32, i32, i32
  }
  func.func @transform_1(%arg0: i32, %arg1: i32) -> (i32, i32) {
    %c0_i32 = arith.constant 0 : i32
    %c0_i32_0 = arith.constant 0 : i32
    %c0_i32_1 = arith.constant 0 : i32
    return %c0_i32, %c0_i32_0 : i32, i32
  }
  func.func @transform_2(%arg0: i32, %arg1: i32) -> (i32, i32) {
    %c0_i32 = arith.constant 0 : i32
    %c0_i32_0 = arith.constant 0 : i32
    %c0_i32_1 = arith.constant 0 : i32
    return %c0_i32, %c0_i32_0 : i32, i32
  }
  func.func @transform_3(%arg0: i32, %arg1: i32) -> (i32, i32, i32, i32) {
    %c2_i32 = arith.constant 2 : i32
    %0 = arith.muli %arg0, %c2_i32 : i32
    %1 = arith.addi %0, %arg1 : i32
    %c0_i32 = arith.constant 0 : i32
    %c0_i32_0 = arith.constant 0 : i32
    %c0_i32_1 = arith.constant 0 : i32
    %c0_i32_2 = arith.constant 0 : i32
    return %1, %c0_i32, %c0_i32_0, %c0_i32_1 : i32, i32, i32, i32
  }
}

</mosaic_0001>

<llo_original>
// kernel: tpu_custom_call.1
$region0: #{tpu_custom_call.1}
  #allocation0 [shape = 'u32[]', space=smem, size = 0x4, offset = 0x4, fixed_abs, tag = 'smem constant byte address 0x4 - core index']
  #allocation1 [shape = 'u32[144,128]{1,0:T(1,128)}', space=vmem, size = 0x12000, scoped, tag = 'internal scratch']
  #allocation2 [shape = 'bf16[8,16,36]{2,1,0:T(8,128)(2,1)}', space=vmem, size = 0x8000, scoped, tag = 'scratch operand']
  %s0 = inlined_call_operand.vmem [shape: bf16[4,10,18,4], index: 0, kind: input, shape index: {}]
  %s1 = inlined_call_operand.vmem [shape: bf16[36,8], index: 1, kind: input, shape index: {}]
  %s2 = inlined_call_operand.vmem [shape: f32[1,8], index: 2, kind: input, shape index: {}]
  %s3 = inlined_call_operand.vmem [shape: f32[4,8,16,8], index: 3, kind: output, shape index: {}]
  %s4 = sld [smem:[#allocation0]]
  $region45: #{tpu_custom_call.1} parent=0
    _
  %s6 = ssub.s32 1, %s4
  %s7 = scalar_select 0, %s6, %s4
  loop: start=0, step=1, limit=6
  $region2: #{tpu_custom_call.1} parent=0 // loop_pre_header
    _
  $region3: #{tpu_custom_call.1} parent=0 // loop_header
    %s9 = sphi 0, %s13
    %p10 = scmp.ge.s32.totalorder %s9, 6
    %s16 = sphi 0, %s28
    %s17 = sphi 0, %s24
    %s18 = sphi 0, %s16
    %s19 = sphi 0, %s17
    %s20 = sphi 0, %s18
    %s21 = sphi 0, %s19
    %s35 = sphi 0, %s37
    %s38 = sphi 0, %s35
    %s39 = sphi 0, %s38
    %s55 = sphi 0, %s39
    %s59 = sphi 0, %s59
    %s61 = sphi 0, %s59
    %s62 = sphi 0, %s61
    %s76 = sphi 0, %s62
    %s80 = sphi 0, %s80
    %s82 = sphi 0, %s80
    %s83 = sphi 0, %s82
    %s97 = sphi 0, %s83
    %s107 = sphi 0, %s109
    %s110 = sphi 0, %s107
    %s111 = sphi 0, %s110
    %s127 = sphi 0, %s111
  $region4: #{tpu_custom_call.1} parent=0 // loop_header_branch
    %12 = sbr.rel (%p10) target = $region8
  $region5: #{tpu_custom_call.1} parent=0 // loop_body
    %s14 = ssub.s32 %s9, 1
    %s15 = ssub.s32 %s9, 2
    %s22 = sadd.s32 1, %s17
    %p23 = scmp.ge.s32.totalorder %s22, 2
    %s24 = scalar_select %p23, 0, %s22
    %s25 = sadd.s32 1, %s16
    %s26 = scalar_select %p23, %s25, %s16
    %p27 = scmp.ge.s32.totalorder %s26, 2
    %s28 = scalar_select %p27, 0, %s26
    %s29 = smul.u32 %s16, 2
    %s30 = sadd.s32 %s29, %s17
    %s31 = smul.u32 %s28, 2
    %s32 = sadd.s32 %s31, %s24
    %s33 = ssub.s32 %s30, %s32
    %p34 = scmp.eq.s32.totalorder %s33, 0
    %s36 = sadd.s32 %s35, 1
    %s37 = scalar_select %p34, %s35, %s36
    %p40 = pneg %p34
    %p41 = scmp.eq.s32.totalorder %s9, 3
    %p42 = por %p40, %p41
    %p43 = scmp.ne.s32.totalorder %s35, %s38
    %p44 = scmp.eq.s32.totalorder %s9, 0
    %p45 = por %p43, %p44
    %p46 = scmp.ne.s32.totalorder %s35, %s38
    %p47 = scmp.eq.s32.totalorder %s14, 3
    %p48 = por %p46, %p47
    %p49 = scmp.ne.s32.totalorder %s38, %s39
    %p50 = scmp.eq.s32.totalorder %s14, 0
    %p51 = por %p49, %p50
    %p52 = scmp.ne.s32.totalorder %s38, %s39
    %p53 = scmp.eq.s32.totalorder %s15, 3
    %p54 = por %p52, %p53
    %p56 = scmp.ne.s32.totalorder %s39, %s55
    %p57 = scmp.eq.s32.totalorder %s15, 0
    %p58 = por %p56, %p57
    %s60 = sadd.s32 %s59, 1
    %p63 = scmp.eq.s32.totalorder %s9, 3
    %p64 = scmp.ne.s32.totalorder %s59, %s61
    %p65 = scmp.eq.s32.totalorder %s9, 0
    %p66 = por %p64, %p65
    %p67 = scmp.ne.s32.totalorder %s59, %s61
    %p68 = scmp.eq.s32.totalorder %s14, 3
    %p69 = por %p67, %p68
    %p70 = scmp.ne.s32.totalorder %s61, %s62
    %p71 = scmp.eq.s32.totalorder %s14, 0
    %p72 = por %p70, %p71
    %p73 = scmp.ne.s32.totalorder %s61, %s62
    %p74 = scmp.eq.s32.totalorder %s15, 3
    %p75 = por %p73, %p74
    %p77 = scmp.ne.s32.totalorder %s62, %s76
    %p78 = scmp.eq.s32.totalorder %s15, 0
    %p79 = por %p77, %p78
    %s81 = sadd.s32 %s80, 1
    %p84 = scmp.eq.s32.totalorder %s9, 3
    %p85 = scmp.ne.s32.totalorder %s80, %s82
    %p86 = scmp.eq.s32.totalorder %s9, 0
    %p87 = por %p85, %p86
    %p88 = scmp.ne.s32.totalorder %s80, %s82
    %p89 = scmp.eq.s32.totalorder %s14, 3
    %p90 = por %p88, %p89
    %p91 = scmp.ne.s32.totalorder %s82, %s83
    %p92 = scmp.eq.s32.totalorder %s14, 0
    %p93 = por %p91, %p92
    %p94 = scmp.ne.s32.totalorder %s82, %s83
    %p95 = scmp.eq.s32.totalorder %s15, 3
    %p96 = por %p94, %p95
    %p98 = scmp.ne.s32.totalorder %s83, %s97
    %p99 = scmp.eq.s32.totalorder %s15, 0
    %p100 = por %p98, %p99
    %s101 = smul.u32 %s16, 2
    %s102 = sadd.s32 %s101, %s17
    %s103 = smul.u32 %s28, 2
    %s104 = sadd.s32 %s103, %s24
    %s105 = ssub.s32 %s102, %s104
    %p106 = scmp.eq.s32.totalorder %s105, 0
    %s108 = sadd.s32 %s107, 1
    %s109 = scalar_select %p106, %s107, %s108
    %p112 = pneg %p106
    %p113 = scmp.eq.s32.totalorder %s9, 3
    %p114 = por %p112, %p113
    %p115 = scmp.ne.s32.totalorder %s107, %s110
    %p116 = scmp.eq.s32.totalorder %s9, 0
    %p117 = por %p115, %p116
    %p118 = scmp.ne.s32.totalorder %s107, %s110
    %p119 = scmp.eq.s32.totalorder %s14, 3
    %p120 = por %p118, %p119
    %p121 = scmp.ne.s32.totalorder %s110, %s111
    %p122 = scmp.eq.s32.totalorder %s14, 0
    %p123 = por %p121, %p122
    %p124 = scmp.ne.s32.totalorder %s110, %s111
    %p125 = scmp.eq.s32.totalorder %s15, 3
    %p126 = por %p124, %p125
    %p128 = scmp.ne.s32.totalorder %s111, %s127
    %p129 = scmp.eq.s32.totalorder %s15, 0
    %p130 = por %p128, %p129
    %p131 = scmp.le.s32.totalorder 1, %s9
    %p132 = scmp.lt.s32.totalorder %s9, 5
    %p133 = pnand %p131, %p132
    %p134 = pneg %p133
    // Predicated region
    $region9: #{tpu_custom_call.1} parent=5 // pred_check
      _
    $region10: #{tpu_custom_call.1} parent=5 // pred_check_branch
      %136 = sbr.rel (%p133) target = $region12
    $region11: #{tpu_custom_call.1} parent=5 // pred_region
      %s137 = ssub.s32 %s9, 1
      // Predicated region
      $region13: #{tpu_custom_call.1} parent=11 // pred_check
        %p138 = pneg %p72
      $region14: #{tpu_custom_call.1} parent=11 // pred_check_branch
        %140 = sbr.rel (%p138) target = $region16
      $region15: #{tpu_custom_call.1} parent=11 // pred_region
        _
      $region16: #{tpu_custom_call.1} parent=11 // pred_fallthru
        _
      // Predicated region
      $region17: #{tpu_custom_call.1} parent=11 // pred_check
        %p141 = pneg %p93
      $region18: #{tpu_custom_call.1} parent=11 // pred_check_branch
        %143 = sbr.rel (%p141) target = $region20
      $region19: #{tpu_custom_call.1} parent=11 // pred_region
        _
      $region20: #{tpu_custom_call.1} parent=11 // pred_fallthru
        _
    $region12: #{tpu_custom_call.1} parent=5 // pred_fallthru
      _
    %p144 = scmp.lt.s32.totalorder %s9, 4
    // Predicated region
    $region21: #{tpu_custom_call.1} parent=5 // pred_check
      %p145 = pneg %p144
    $region22: #{tpu_custom_call.1} parent=5 // pred_check_branch
      %147 = sbr.rel (%p145) target = $region24
    $region23: #{tpu_custom_call.1} parent=5 // pred_region
      // Predicated region
      $region25: #{tpu_custom_call.1} parent=23 // pred_check
        %p148 = pneg %p45
      $region26: #{tpu_custom_call.1} parent=23 // pred_check_branch
        %150 = sbr.rel (%p148) target = $region28
      $region27: #{tpu_custom_call.1} parent=23 // pred_region
        %s151 = smul.u32 %s16, 2
        %s152 = sadd.s32 %s151, %s17
        %p153 = scmp.lt.s32.totalorder %s152, 3
        %s154 = scalar_select %p153, %s152, 3
        %s155 = smul.addr %s154, 30
        %s156 = smul.addr %s155, 4
        %s157 = scalar_lea.vmem %s0, %s156
        %s158 = smul.u32 %s16, 2
        %s159 = sadd.s32 %s158, %s17
      $region28: #{tpu_custom_call.1} parent=23 // pred_fallthru
        _
    $region24: #{tpu_custom_call.1} parent=5 // pred_fallthru
      _
    %p160 = scmp.le.s32.totalorder 1, %s9
    %p161 = scmp.lt.s32.totalorder %s9, 5
    %p162 = pnand %p160, %p161
    %p163 = pneg %p162
    // Predicated region
    $region29: #{tpu_custom_call.1} parent=5 // pred_check
      _
    $region30: #{tpu_custom_call.1} parent=5 // pred_check_branch
      %165 = sbr.rel (%p162) target = $region32
    $region31: #{tpu_custom_call.1} parent=5 // pred_region
      %s166 = ssub.s32 %s9, 1
      %s167 = smul.u32 %s18, 2
      %s168 = sadd.s32 %s167, %s19
      %p169 = scmp.lt.s32.totalorder %s168, 3
      %s170 = scalar_select %p169, %s168, 3
      %s171 = smul.addr %s170, 30
      %s172 = smul.addr %s171, 4
      %s173 = scalar_lea.vmem %s0, %s172
      %p174 = pneg %p51
      %p175 = pneg %p48
      %p176 = pneg %p72
      %p177 = pneg %p69
      %p178 = pneg %p93
      %p179 = pneg %p90
      %p180 = pneg %p123
      %p181 = pneg %p120
      %s182 = smul.u32 %s18, 2
      %s183 = sadd.s32 %s182, %s19
      %p184 = scmp.lt.s32.totalorder %s183, 3
      %s185 = scalar_select %p184, %s183, 3
      %s186 = smul.addr %s185, 16
      %s187 = smul.addr %s186, 8
      %s188 = scalar_lea.vmem %s3, %s187
      %s189 = smul.u32 %s18, 2
      %s190 = sadd.s32 %s189, %s19
      %p191 = scmp.lt.s32.totalorder %s190, 3
      %s192 = scalar_select %p191, %s190, 3
      %s193 = smul.addr %s192, 30
      %s194 = smul.addr %s193, 4
      %s195 = scalar_lea.vmem %s0, %s194
      %s196 = smul.u32 %s18, 2
      %s197 = sadd.s32 %s196, %s19
      %s198 = smul.u32 %s18, 2
      %s199 = sadd.s32 %s198, %s19
      %p200 = scmp.lt.s32.totalorder %s199, 3
      %s201 = scalar_select %p200, %s199, 3
      %s202 = smul.addr %s201, 16
      %s203 = smul.addr %s202, 8
      %s204 = scalar_lea.vmem %s3, %s203
      %s205 = smul.u32 %s18, 2
      %s206 = sadd.s32 %s205, %s19
      %v208 = vld [vmem:[%s195] sm:$0xf]
      %v209 = vld [vmem:[%s195 + $0x4] sm:$0xf]
      %v210 = vld [vmem:[%s195 + $0xc] sm:$0xf]
      %v211 = vld [vmem:[%s195 + $0x10] sm:$0xf]
      %v212 = vld [vmem:[%s195 + $0x18] sm:$0xf]
      %v213 = vld [vmem:[%s195 + $0x1c] sm:$0xf]
      %v214 = vld [vmem:[%s195 + $0x24] sm:$0xf]
      %v215 = vld [vmem:[%s195 + $0x28] sm:$0xf]
      %v216 = vld [vmem:[%s195 + $0x30] sm:$0xf]
      %v217 = vld [vmem:[%s195 + $0x34] sm:$0xf]
      %v218 = vld [vmem:[%s195 + $0x3c] sm:$0xf]
      %v219 = vld [vmem:[%s195 + $0x40] sm:$0xf]
      %v220 = vld [vmem:[%s195 + $0x48] sm:$0xf]
      %v221 = vld [vmem:[%s195 + $0x4c] sm:$0xf]
      %v222 = vld [vmem:[%s195 + $0x54] sm:$0xf]
      %v223 = vld [vmem:[%s195 + $0x58] sm:$0xf]
      %vm224 = vcmask 27648
      %225 = vst.msk [vmem:[#allocation2] sm:$0xf] %vm224, %v208
      %226 = vst.msk [vmem:[#allocation2 + $0x4] sm:$0xf] %vm224, %v209
      %227 = vst.msk [vmem:[#allocation2 + $0x8] sm:$0xf] %vm224, %v210
      %228 = vst.msk [vmem:[#allocation2 + $0xc] sm:$0xf] %vm224, %v211
      %229 = vst.msk [vmem:[#allocation2 + $0x10] sm:$0xf] %vm224, %v212
      %230 = vst.msk [vmem:[#allocation2 + $0x14] sm:$0xf] %vm224, %v213
      %231 = vst.msk [vmem:[#allocation2 + $0x18] sm:$0xf] %vm224, %v214
      %232 = vst.msk [vmem:[#allocation2 + $0x1c] sm:$0xf] %vm224, %v215
      %233 = vst.msk [vmem:[#allocation2 + $0x20] sm:$0xf] %vm224, %v216
      %234 = vst.msk [vmem:[#allocation2 + $0x24] sm:$0xf] %vm224, %v217
      %235 = vst.msk [vmem:[#allocation2 + $0x28] sm:$0xf] %vm224, %v218
      %236 = vst.msk [vmem:[#allocation2 + $0x2c] sm:$0xf] %vm224, %v219
      %237 = vst.msk [vmem:[#allocation2 + $0x30] sm:$0xf] %vm224, %v220
      %238 = vst.msk [vmem:[#allocation2 + $0x34] sm:$0xf] %vm224, %v221
      %239 = vst.msk [vmem:[#allocation2 + $0x38] sm:$0xf] %vm224, %v222
      %240 = vst.msk [vmem:[#allocation2 + $0x3c] sm:$0xf] %vm224, %v223
      %v241 = vld [vmem:[%s195] sm:$0xf]
      %v242 = vld [vmem:[%s195 + $0x4] sm:$0xf]
      %v243 = vld [vmem:[%s195 + $0x8] sm:$0x1]
      %v244 = vld [vmem:[%s195 + $0xc] sm:$0xf]
      %v245 = vld [vmem:[%s195 + $0x10] sm:$0xf]
      %v246 = vld [vmem:[%s195 + $0x14] sm:$0x1]
      %v247 = vld [vmem:[%s195 + $0x18] sm:$0xf]
      %v248 = vld [vmem:[%s195 + $0x1c] sm:$0xf]
      %v249 = vld [vmem:[%s195 + $0x20] sm:$0x1]
      %v250 = vld [vmem:[%s195 + $0x24] sm:$0xf]
      %v251 = vld [vmem:[%s195 + $0x28] sm:$0xf]
      %v252 = vld [vmem:[%s195 + $0x2c] sm:$0x1]
      %v253 = vld [vmem:[%s195 + $0x30] sm:$0xf]
      %v254 = vld [vmem:[%s195 + $0x34] sm:$0xf]
      %v255 = vld [vmem:[%s195 + $0x38] sm:$0x1]
      %v256 = vld [vmem:[%s195 + $0x3c] sm:$0xf]
      %v257 = vld [vmem:[%s195 + $0x40] sm:$0xf]
      %v258 = vld [vmem:[%s195 + $0x44] sm:$0x1]
      %v259 = vld [vmem:[%s195 + $0x48] sm:$0xf]
      %v260 = vld [vmem:[%s195 + $0x4c] sm:$0xf]
      %v261 = vld [vmem:[%s195 + $0x50] sm:$0x1]
      %v262 = vld [vmem:[%s195 + $0x54] sm:$0xf]
      %v263 = vld [vmem:[%s195 + $0x58] sm:$0xf]
      %v264 = vld [vmem:[%s195 + $0x5c] sm:$0x1]
      %vm265 = vsmask.f32 3328
      %vm266 = vsmask.f32 7440
      %vm267 = vmor %vm265, %vm266
      %v269 = vshrl.u32 %v241, 16
      %v271 = vrot.slane %v269, 4
      %v272 = vshll.u32 %v241, 16
      %v274 = vrot.slane %v272, 5
      %v275 = vor.u32 %v271, %v274
      %v276 = vrot.slane %v275, 4
      %v278 = vshll.u32 %v242, 16
      %v280 = vrot.slane %v278, 5
      %v281 = vsel %vm267, %v276, %v280
      %v282 = vshrl.u32 %v242, 16
      %v284 = vrot.slane %v282, 4
      %v285 = vor.u32 %v284, %v280
      %v286 = vrot.slane %v285, 4
      %v288 = vshll.u32 %v243, 16
      %v290 = vrot.slane %v288, 5
      %v291 = vsel %vm267, %v286, %v290
      %v293 = vshrl.u32 %v244, 16
      %v295 = vrot.slane %v293, 4
      %v296 = vshll.u32 %v244, 16
      %v298 = vrot.slane %v296, 5
      %v299 = vor.u32 %v295, %v298
      %v300 = vrot.slane %v299, 4
      %v302 = vshll.u32 %v245, 16
      %v304 = vrot.slane %v302, 5
      %v305 = vsel %vm267, %v300, %v304
      %v306 = vshrl.u32 %v245, 16
      %v308 = vrot.slane %v306, 4
      %v309 = vor.u32 %v308, %v304
      %v310 = vrot.slane %v309, 4
      %v312 = vshll.u32 %v246, 16
      %v314 = vrot.slane %v312, 5
      %v315 = vsel %vm267, %v310, %v314
      %v317 = vshrl.u32 %v247, 16
      %v319 = vrot.slane %v317, 4
      %v320 = vshll.u32 %v247, 16
      %v322 = vrot.slane %v320, 5
      %v323 = vor.u32 %v319, %v322
      %v324 = vrot.slane %v323, 4
      %v326 = vshll.u32 %v248, 16
      %v328 = vrot.slane %v326, 5
      %v329 = vsel %vm267, %v324, %v328
      %v330 = vshrl.u32 %v248, 16
      %v332 = vrot.slane %v330, 4
      %v333 = vor.u32 %v332, %v328
      %v334 = vrot.slane %v333, 4
      %v336 = vshll.u32 %v249, 16
      %v338 = vrot.slane %v336, 5
      %v339 = vsel %vm267, %v334, %v338
      %v341 = vshrl.u32 %v250, 16
      %v343 = vrot.slane %v341, 4
      %v344 = vshll.u32 %v250, 16
      %v346 = vrot.slane %v344, 5
      %v347 = vor.u32 %v343, %v346
      %v348 = vrot.slane %v347, 4
      %v350 = vshll.u32 %v251, 16
      %v352 = vrot.slane %v350, 5
      %v353 = vsel %vm267, %v348, %v352
      %v354 = vshrl.u32 %v251, 16
      %v356 = vrot.slane %v354, 4
      %v357 = vor.u32 %v356, %v352
      %v358 = vrot.slane %v357, 4
      %v360 = vshll.u32 %v252, 16
      %v362 = vrot.slane %v360, 5
      %v363 = vsel %vm267, %v358, %v362
      %v365 = vshrl.u32 %v253, 16
      %v367 = vrot.slane %v365, 4
      %v368 = vshll.u32 %v253, 16
      %v370 = vrot.slane %v368, 5
      %v371 = vor.u32 %v367, %v370
      %v372 = vrot.slane %v371, 4
      %v374 = vshll.u32 %v254, 16
      %v376 = vrot.slane %v374, 5
      %v377 = vsel %vm267, %v372, %v376
      %v378 = vshrl.u32 %v254, 16
      %v380 = vrot.slane %v378, 4
      %v381 = vor.u32 %v380, %v376
      %v382 = vrot.slane %v381, 4
      %v384 = vshll.u32 %v255, 16
      %v386 = vrot.slane %v384, 5
      %v387 = vsel %vm267, %v382, %v386
      %v389 = vshrl.u32 %v256, 16
      %v391 = vrot.slane %v389, 4
      %v392 = vshll.u32 %v256, 16
      %v394 = vrot.slane %v392, 5
      %v395 = vor.u32 %v391, %v394
      %v396 = vrot.slane %v395, 4
      %v398 = vshll.u32 %v257, 16
      %v400 = vrot.slane %v398, 5
      %v401 = vsel %vm267, %v396, %v400
      %v402 = vshrl.u32 %v257, 16
      %v404 = vrot.slane %v402, 4
      %v405 = vor.u32 %v404, %v400
      %v406 = vrot.slane %v405, 4
      %v408 = vshll.u32 %v258, 16
      %v410 = vrot.slane %v408, 5
      %v411 = vsel %vm267, %v406, %v410
      %v413 = vshrl.u32 %v259, 16
      %v415 = vrot.slane %v413, 4
      %v416 = vshll.u32 %v259, 16
      %v418 = vrot.slane %v416, 5
      %v419 = vor.u32 %v415, %v418
      %v420 = vrot.slane %v419, 4
      %v422 = vshll.u32 %v260, 16
      %v424 = vrot.slane %v422, 5
      %v425 = vsel %vm267, %v420, %v424
      %v426 = vshrl.u32 %v260, 16
      %v428 = vrot.slane %v426, 4
      %v429 = vor.u32 %v428, %v424
      %v430 = vrot.slane %v429, 4
      %v432 = vshll.u32 %v261, 16
      %v434 = vrot.slane %v432, 5
      %v435 = vsel %vm267, %v430, %v434
      %v437 = vshrl.u32 %v262, 16
      %v439 = vrot.slane %v437, 4
      %v440 = vshll.u32 %v262, 16
      %v442 = vrot.slane %v440, 5
      %v443 = vor.u32 %v439, %v442
      %v444 = vrot.slane %v443, 4
      %v446 = vshll.u32 %v263, 16
      %v448 = vrot.slane %v446, 5
      %v449 = vsel %vm267, %v444, %v448
      %v450 = vshrl.u32 %v263, 16
      %v452 = vrot.slane %v450, 4
      %v453 = vor.u32 %v452, %v448
      %v454 = vrot.slane %v453, 4
      %v456 = vshll.u32 %v264, 16
      %v458 = vrot.slane %v456, 5
      %v459 = vsel %vm267, %v454, %v458
      %460 = vrot.lane.b32.xlu0 %v281, 4
      %v461 = vpop.permute.xlu0 %460
      %462 = vrot.lane.b32.xlu0 %v291, 4
      %v463 = vpop.permute.xlu0 %462
      %464 = vrot.lane.b32.xlu0 %v305, 4
      %v465 = vpop.permute.xlu0 %464
      %466 = vrot.lane.b32.xlu0 %v315, 4
      %v467 = vpop.permute.xlu0 %466
      %468 = vrot.lane.b32.xlu0 %v329, 4
      %v469 = vpop.permute.xlu0 %468
      %470 = vrot.lane.b32.xlu0 %v339, 4
      %v471 = vpop.permute.xlu0 %470
      %472 = vrot.lane.b32.xlu0 %v353, 4
      %v473 = vpop.permute.xlu0 %472
      %474 = vrot.lane.b32.xlu0 %v363, 4
      %v475 = vpop.permute.xlu0 %474
      %476 = vrot.lane.b32.xlu0 %v377, 4
      %v477 = vpop.permute.xlu0 %476
      %478 = vrot.lane.b32.xlu0 %v387, 4
      %v479 = vpop.permute.xlu0 %478
      %480 = vrot.lane.b32.xlu0 %v401, 4
      %v481 = vpop.permute.xlu0 %480
      %482 = vrot.lane.b32.xlu0 %v411, 4
      %v483 = vpop.permute.xlu0 %482
      %484 = vrot.lane.b32.xlu0 %v425, 4
      %v485 = vpop.permute.xlu0 %484
      %486 = vrot.lane.b32.xlu0 %v435, 4
      %v487 = vpop.permute.xlu0 %486
      %488 = vrot.lane.b32.xlu0 %v449, 4
      %v489 = vpop.permute.xlu0 %488
      %490 = vrot.lane.b32.xlu0 %v459, 4
      %v491 = vpop.permute.xlu0 %490
      %vm508 = vcmask 60448
      %509 = vst.msk [vmem:[#allocation2] sm:$0xf] %vm508, %v461
      %510 = vst.msk [vmem:[#allocation2 + $0x4] sm:$0xf] %vm508, %v463
      %511 = vst.msk [vmem:[#allocation2 + $0x8] sm:$0xf] %vm508, %v465
      %512 = vst.msk [vmem:[#allocation2 + $0xc] sm:$0xf] %vm508, %v467
      %513 = vst.msk [vmem:[#allocation2 + $0x10] sm:$0xf] %vm508, %v469
      %514 = vst.msk [vmem:[#allocation2 + $0x14] sm:$0xf] %vm508, %v471
      %515 = vst.msk [vmem:[#allocation2 + $0x18] sm:$0xf] %vm508, %v473
      %516 = vst.msk [vmem:[#allocation2 + $0x1c] sm:$0xf] %vm508, %v475
      %517 = vst.msk [vmem:[#allocation2 + $0x20] sm:$0xf] %vm508, %v477
      %518 = vst.msk [vmem:[#allocation2 + $0x24] sm:$0xf] %vm508, %v479
      %519 = vst.msk [vmem:[#allocation2 + $0x28] sm:$0xf] %vm508, %v481
      %520 = vst.msk [vmem:[#allocation2 + $0x2c] sm:$0xf] %vm508, %v483
      %521 = vst.msk [vmem:[#allocation2 + $0x30] sm:$0xf] %vm508, %v485
      %522 = vst.msk [vmem:[#allocation2 + $0x34] sm:$0xf] %vm508, %v487
      %523 = vst.msk [vmem:[#allocation2 + $0x38] sm:$0xf] %vm508, %v489
      %524 = vst.msk [vmem:[#allocation2 + $0x3c] sm:$0xf] %vm508, %v491
      %v525 = vld [vmem:[%s195] sm:$0xe]
      %v526 = vld [vmem:[%s195 + $0x4] sm:$0xf]
      %v527 = vld [vmem:[%s195 + $0x8] sm:$0x1]
      %v528 = vld [vmem:[%s195 + $0xc] sm:$0xe]
      %v529 = vld [vmem:[%s195 + $0x10] sm:$0xf]
      %v530 = vld [vmem:[%s195 + $0x14] sm:$0x1]
      %v531 = vld [vmem:[%s195 + $0x18] sm:$0xe]
      %v532 = vld [vmem:[%s195 + $0x1c] sm:$0xf]
      %v533 = vld [vmem:[%s195 + $0x20] sm:$0x1]
      %v534 = vld [vmem:[%s195 + $0x24] sm:$0xe]
      %v535 = vld [vmem:[%s195 + $0x28] sm:$0xf]
      %v536 = vld [vmem:[%s195 + $0x2c] sm:$0x1]
      %v537 = vld [vmem:[%s195 + $0x30] sm:$0xe]
      %v538 = vld [vmem:[%s195 + $0x34] sm:$0xf]
      %v539 = vld [vmem:[%s195 + $0x38] sm:$0x1]
      %v540 = vld [vmem:[%s195 + $0x3c] sm:$0xe]
      %v541 = vld [vmem:[%s195 + $0x40] sm:$0xf]
      %v542 = vld [vmem:[%s195 + $0x44] sm:$0x1]
      %v543 = vld [vmem:[%s195 + $0x48] sm:$0xe]
      %v544 = vld [vmem:[%s195 + $0x4c] sm:$0xf]
      %v545 = vld [vmem:[%s195 + $0x50] sm:$0x1]
      %v546 = vld [vmem:[%s195 + $0x54] sm:$0xe]
      %v547 = vld [vmem:[%s195 + $0x58] sm:$0xf]
      %v548 = vld [vmem:[%s195 + $0x5c] sm:$0x1]
      %vm573 = vcmask 1042432
      %vm574 = vcmask 1046532
      %vm575 = vmor %vm573, %vm574
      %v576 = vrot.slane %v525, 5
      %v577 = vrot.slane %v576, 4
      %v578 = vrot.slane %v526, 5
      %v579 = vsel %vm575, %v577, %v578
      %v580 = vrot.slane %v578, 4
      %v581 = vrot.slane %v527, 5
      %v582 = vsel %vm575, %v580, %v581
      %v583 = vrot.slane %v528, 5
      %v584 = vrot.slane %v583, 4
      %v585 = vrot.slane %v529, 5
      %v586 = vsel %vm575, %v584, %v585
      %v587 = vrot.slane %v585, 4
      %v588 = vrot.slane %v530, 5
      %v589 = vsel %vm575, %v587, %v588
      %v590 = vrot.slane %v531, 5
      %v591 = vrot.slane %v590, 4
      %v592 = vrot.slane %v532, 5
      %v593 = vsel %vm575, %v591, %v592
      %v594 = vrot.slane %v592, 4
      %v595 = vrot.slane %v533, 5
      %v596 = vsel %vm575, %v594, %v595
      %v597 = vrot.slane %v534, 5
      %v598 = vrot.slane %v597, 4
      %v599 = vrot.slane %v535, 5
      %v600 = vsel %vm575, %v598, %v599
      %v601 = vrot.slane %v599, 4
      %v602 = vrot.slane %v536, 5
      %v603 = vsel %vm575, %v601, %v602
      %v604 = vrot.slane %v537, 5
      %v605 = vrot.slane %v604, 4
      %v606 = vrot.slane %v538, 5
      %v607 = vsel %vm575, %v605, %v606
      %v608 = vrot.slane %v606, 4
      %v609 = vrot.slane %v539, 5
      %v610 = vsel %vm575, %v608, %v609
      %v611 = vrot.slane %v540, 5
      %v612 = vrot.slane %v611, 4
      %v613 = vrot.slane %v541, 5
      %v614 = vsel %vm575, %v612, %v613
      %v615 = vrot.slane %v613, 4
      %v616 = vrot.slane %v542, 5
      %v617 = vsel %vm575, %v615, %v616
      %v618 = vrot.slane %v543, 5
      %v619 = vrot.slane %v618, 4
      %v620 = vrot.slane %v544, 5
      %v621 = vsel %vm575, %v619, %v620
      %v622 = vrot.slane %v620, 4
      %v623 = vrot.slane %v545, 5
      %v624 = vsel %vm575, %v622, %v623
      %v625 = vrot.slane %v546, 5
      %v626 = vrot.slane %v625, 4
      %v627 = vrot.slane %v547, 5
      %v628 = vsel %vm575, %v626, %v627
      %v629 = vrot.slane %v627, 4
      %v630 = vrot.slane %v548, 5
      %v631 = vsel %vm575, %v629, %v630
      %632 = vrot.lane.b32.xlu0 %v579, 8
      %v633 = vpop.permute.xlu0 %632
      %634 = vrot.lane.b32.xlu0 %v582, 8
      %v635 = vpop.permute.xlu0 %634
      %636 = vrot.lane.b32.xlu0 %v586, 8
      %v637 = vpop.permute.xlu0 %636
      %638 = vrot.lane.b32.xlu0 %v589, 8
      %v639 = vpop.permute.xlu0 %638
      %640 = vrot.lane.b32.xlu0 %v593, 8
      %v641 = vpop.permute.xlu0 %640
      %642 = vrot.lane.b32.xlu0 %v596, 8
      %v643 = vpop.permute.xlu0 %642
      %644 = vrot.lane.b32.xlu0 %v600, 8
      %v645 = vpop.permute.xlu0 %644
      %646 = vrot.lane.b32.xlu0 %v603, 8
      %v647 = vpop.permute.xlu0 %646
      %648 = vrot.lane.b32.xlu0 %v607, 8
      %v649 = vpop.permute.xlu0 %648
      %650 = vrot.lane.b32.xlu0 %v610, 8
      %v651 = vpop.permute.xlu0 %650
      %652 = vrot.lane.b32.xlu0 %v614, 8
      %v653 = vpop.permute.xlu0 %652
      %654 = vrot.lane.b32.xlu0 %v617, 8
      %v655 = vpop.permute.xlu0 %654
      %656 = vrot.lane.b32.xlu0 %v621, 8
      %v657 = vpop.permute.xlu0 %656
      %658 = vrot.lane.b32.xlu0 %v624, 8
      %v659 = vpop.permute.xlu0 %658
      %660 = vrot.lane.b32.xlu0 %v628, 8
      %v661 = vpop.permute.xlu0 %660
      %662 = vrot.lane.b32.xlu0 %v631, 8
      %v663 = vpop.permute.xlu0 %662
      %vm680 = vcmask 93248
      %681 = vst.msk [vmem:[#allocation2] sm:$0xf] %vm680, %v633
      %682 = vst.msk [vmem:[#allocation2 + $0x4] sm:$0xf] %vm680, %v635
      %683 = vst.msk [vmem:[#allocation2 + $0x8] sm:$0xf] %vm680, %v637
      %684 = vst.msk [vmem:[#allocation2 + $0xc] sm:$0xf] %vm680, %v639
      %685 = vst.msk [vmem:[#allocation2 + $0x10] sm:$0xf] %vm680, %v641
      %686 = vst.msk [vmem:[#allocation2 + $0x14] sm:$0xf] %vm680, %v643
      %687 = vst.msk [vmem:[#allocation2 + $0x18] sm:$0xf] %vm680, %v645
      %688 = vst.msk [vmem:[#allocation2 + $0x1c] sm:$0xf] %vm680, %v647
      %689 = vst.msk [vmem:[#allocation2 + $0x20] sm:$0xf] %vm680, %v649
      %690 = vst.msk [vmem:[#allocation2 + $0x24] sm:$0xf] %vm680, %v651
      %691 = vst.msk [vmem:[#allocation2 + $0x28] sm:$0xf] %vm680, %v653
      %692 = vst.msk [vmem:[#allocation2 + $0x2c] sm:$0xf] %vm680, %v655
      %693 = vst.msk [vmem:[#allocation2 + $0x30] sm:$0xf] %vm680, %v657
      %694 = vst.msk [vmem:[#allocation2 + $0x34] sm:$0xf] %vm680, %v659
      %695 = vst.msk [vmem:[#allocation2 + $0x38] sm:$0xf] %vm680, %v661
      %696 = vst.msk [vmem:[#allocation2 + $0x3c] sm:$0xf] %vm680, %v663
      %s697 = scalar_lea.vmem %s195, 12
      %v698 = vld [vmem:[%s697] sm:$0xf]
      %v699 = vld [vmem:[%s697 + $0x4] sm:$0xf]
      %v700 = vld [vmem:[%s697 + $0xc] sm:$0xf]
      %v701 = vld [vmem:[%s697 + $0x10] sm:$0xf]
      %v702 = vld [vmem:[%s697 + $0x18] sm:$0xf]
      %v703 = vld [vmem:[%s697 + $0x1c] sm:$0xf]
      %v704 = vld [vmem:[%s697 + $0x24] sm:$0xf]
      %v705 = vld [vmem:[%s697 + $0x28] sm:$0xf]
      %v706 = vld [vmem:[%s697 + $0x30] sm:$0xf]
      %v707 = vld [vmem:[%s697 + $0x34] sm:$0xf]
      %v708 = vld [vmem:[%s697 + $0x3c] sm:$0xf]
      %v709 = vld [vmem:[%s697 + $0x40] sm:$0xf]
      %v710 = vld [vmem:[%s697 + $0x48] sm:$0xf]
      %v711 = vld [vmem:[%s697 + $0x4c] sm:$0xf]
      %v712 = vld [vmem:[%s697 + $0x54] sm:$0xf]
      %v713 = vld [vmem:[%s697 + $0x58] sm:$0xf]
      %730 = vrot.lane.b32.xlu0 %v698, 12
      %v731 = vpop.permute.xlu0 %730
      %732 = vrot.lane.b32.xlu0 %v699, 12
      %v733 = vpop.permute.xlu0 %732
      %734 = vrot.lane.b32.xlu0 %v700, 12
      %v735 = vpop.permute.xlu0 %734
      %736 = vrot.lane.b32.xlu0 %v701, 12
      %v737 = vpop.permute.xlu0 %736
      %738 = vrot.lane.b32.xlu0 %v702, 12
      %v739 = vpop.permute.xlu0 %738
      %740 = vrot.lane.b32.xlu0 %v703, 12
      %v741 = vpop.permute.xlu0 %740
      %742 = vrot.lane.b32.xlu0 %v704, 12
      %v743 = vpop.permute.xlu0 %742
      %744 = vrot.lane.b32.xlu0 %v705, 12
      %v745 = vpop.permute.xlu0 %744
      %746 = vrot.lane.b32.xlu0 %v706, 12
      %v747 = vpop.permute.xlu0 %746
      %748 = vrot.lane.b32.xlu0 %v707, 12
      %v749 = vpop.permute.xlu0 %748
      %750 = vrot.lane.b32.xlu0 %v708, 12
      %v751 = vpop.permute.xlu0 %750
      %752 = vrot.lane.b32.xlu0 %v709, 12
      %v753 = vpop.permute.xlu0 %752
      %754 = vrot.lane.b32.xlu0 %v710, 12
      %v755 = vpop.permute.xlu0 %754
      %756 = vrot.lane.b32.xlu0 %v711, 12
      %v757 = vpop.permute.xlu0 %756
      %758 = vrot.lane.b32.xlu0 %v712, 12
      %v759 = vpop.permute.xlu0 %758
      %760 = vrot.lane.b32.xlu0 %v713, 12
      %v761 = vpop.permute.xlu0 %760
      %vm778 = vcmask 126048
      %779 = vst.msk [vmem:[#allocation2] sm:$0xf] %vm778, %v731
      %780 = vst.msk [vmem:[#allocation2 + $0x4] sm:$0xf] %vm778, %v733
      %781 = vst.msk [vmem:[#allocation2 + $0x8] sm:$0xf] %vm778, %v735
      %782 = vst.msk [vmem:[#allocation2 + $0xc] sm:$0xf] %vm778, %v737
      %783 = vst.msk [vmem:[#allocation2 + $0x10] sm:$0xf] %vm778, %v739
      %784 = vst.msk [vmem:[#allocation2 + $0x14] sm:$0xf] %vm778, %v741
      %785 = vst.msk [vmem:[#allocation2 + $0x18] sm:$0xf] %vm778, %v743
      %786 = vst.msk [vmem:[#allocation2 + $0x1c] sm:$0xf] %vm778, %v745
      %787 = vst.msk [vmem:[#allocation2 + $0x20] sm:$0xf] %vm778, %v747
      %788 = vst.msk [vmem:[#allocation2 + $0x24] sm:$0xf] %vm778, %v749
      %789 = vst.msk [vmem:[#allocation2 + $0x28] sm:$0xf] %vm778, %v751
      %790 = vst.msk [vmem:[#allocation2 + $0x2c] sm:$0xf] %vm778, %v753
      %791 = vst.msk [vmem:[#allocation2 + $0x30] sm:$0xf] %vm778, %v755
      %792 = vst.msk [vmem:[#allocation2 + $0x34] sm:$0xf] %vm778, %v757
      %793 = vst.msk [vmem:[#allocation2 + $0x38] sm:$0xf] %vm778, %v759
      %794 = vst.msk [vmem:[#allocation2 + $0x3c] sm:$0xf] %vm778, %v761
      %v795 = vld [vmem:[%s697] sm:$0xf]
      %v796 = vld [vmem:[%s697 + $0x4] sm:$0xf]
      %v797 = vld [vmem:[%s697 + $0x8] sm:$0x1]
      %v798 = vld [vmem:[%s697 + $0xc] sm:$0xf]
      %v799 = vld [vmem:[%s697 + $0x10] sm:$0xf]
      %v800 = vld [vmem:[%s697 + $0x14] sm:$0x1]
      %v801 = vld [vmem:[%s697 + $0x18] sm:$0xf]
      %v802 = vld [vmem:[%s697 + $0x1c] sm:$0xf]
      %v803 = vld [vmem:[%s697 + $0x20] sm:$0x1]
      %v804 = vld [vmem:[%s697 + $0x24] sm:$0xf]
      %v805 = vld [vmem:[%s697 + $0x28] sm:$0xf]
      %v806 = vld [vmem:[%s697 + $0x2c] sm:$0x1]
      %v807 = vld [vmem:[%s697 + $0x30] sm:$0xf]
      %v808 = vld [vmem:[%s697 + $0x34] sm:$0xf]
      %v809 = vld [vmem:[%s697 + $0x38] sm:$0x1]
      %v810 = vld [vmem:[%s697 + $0x3c] sm:$0xf]
      %v811 = vld [vmem:[%s697 + $0x40] sm:$0xf]
      %v812 = vld [vmem:[%s697 + $0x44] sm:$0x1]
      %v813 = vld [vmem:[%s697 + $0x48] sm:$0xf]
      %v814 = vld [vmem:[%s697 + $0x4c] sm:$0xf]
      %v815 = vld [vmem:[%s697 + $0x50] sm:$0x1]
      %v816 = vld [vmem:[%s697 + $0x54] sm:$0xf]
      %v817 = vld [vmem:[%s697 + $0x58] sm:$0xf]
      %v818 = vld [vmem:[%s697 + $0x5c] sm:$0x1]
      %v820 = vshrl.u32 %v795, 16
      %v822 = vrot.slane %v820, 4
      %v823 = vshll.u32 %v795, 16
      %v825 = vrot.slane %v823, 5
      %v826 = vor.u32 %v822, %v825
      %v827 = vrot.slane %v826, 4
      %v829 = vshll.u32 %v796, 16
      %v831 = vrot.slane %v829, 5
      %v832 = vsel %vm267, %v827, %v831
      %v833 = vshrl.u32 %v796, 16
      %v835 = vrot.slane %v833, 4
      %v836 = vor.u32 %v835, %v831
      %v837 = vrot.slane %v836, 4
      %v839 = vshll.u32 %v797, 16
      %v841 = vrot.slane %v839, 5
      %v842 = vsel %vm267, %v837, %v841
      %v844 = vshrl.u32 %v798, 16
      %v846 = vrot.slane %v844, 4
      %v847 = vshll.u32 %v798, 16
      %v849 = vrot.slane %v847, 5
      %v850 = vor.u32 %v846, %v849
      %v851 = vrot.slane %v850, 4
      %v853 = vshll.u32 %v799, 16
      %v855 = vrot.slane %v853, 5
      %v856 = vsel %vm267, %v851, %v855
      %v857 = vshrl.u32 %v799, 16
      %v859 = vrot.slane %v857, 4
      %v860 = vor.u32 %v859, %v855
      %v861 = vrot.slane %v860, 4
      %v863 = vshll.u32 %v800, 16
      %v865 = vrot.slane %v863, 5
      %v866 = vsel %vm267, %v861, %v865
      %v868 = vshrl.u32 %v801, 16
      %v870 = vrot.slane %v868, 4
      %v871 = vshll.u32 %v801, 16
      %v873 = vrot.slane %v871, 5
      %v874 = vor.u32 %v870, %v873
      %v875 = vrot.slane %v874, 4
      %v877 = vshll.u32 %v802, 16
      %v879 = vrot.slane %v877, 5
      %v880 = vsel %vm267, %v875, %v879
      %v881 = vshrl.u32 %v802, 16
      %v883 = vrot.slane %v881, 4
      %v884 = vor.u32 %v883, %v879
      %v885 = vrot.slane %v884, 4
      %v887 = vshll.u32 %v803, 16
      %v889 = vrot.slane %v887, 5
      %v890 = vsel %vm267, %v885, %v889
      %v892 = vshrl.u32 %v804, 16
      %v894 = vrot.slane %v892, 4
      %v895 = vshll.u32 %v804, 16
      %v897 = vrot.slane %v895, 5
      %v898 = vor.u32 %v894, %v897
      %v899 = vrot.slane %v898, 4
      %v901 = vshll.u32 %v805, 16
      %v903 = vrot.slane %v901, 5
      %v904 = vsel %vm267, %v899, %v903
      %v905 = vshrl.u32 %v805, 16
      %v907 = vrot.slane %v905, 4
      %v908 = vor.u32 %v907, %v903
      %v909 = vrot.slane %v908, 4
      %v911 = vshll.u32 %v806, 16
      %v913 = vrot.slane %v911, 5
      %v914 = vsel %vm267, %v909, %v913
      %v916 = vshrl.u32 %v807, 16
      %v918 = vrot.slane %v916, 4
      %v919 = vshll.u32 %v807, 16
      %v921 = vrot.slane %v919, 5
      %v922 = vor.u32 %v918, %v921
      %v923 = vrot.slane %v922, 4
      %v925 = vshll.u32 %v808, 16
      %v927 = vrot.slane %v925, 5
      %v928 = vsel %vm267, %v923, %v927
      %v929 = vshrl.u32 %v808, 16
      %v931 = vrot.slane %v929, 4
      %v932 = vor.u32 %v931, %v927
      %v933 = vrot.slane %v932, 4
      %v935 = vshll.u32 %v809, 16
      %v937 = vrot.slane %v935, 5
      %v938 = vsel %vm267, %v933, %v937
      %v940 = vshrl.u32 %v810, 16
      %v942 = vrot.slane %v940, 4
      %v943 = vshll.u32 %v810, 16
      %v945 = vrot.slane %v943, 5
      %v946 = vor.u32 %v942, %v945
      %v947 = vrot.slane %v946, 4
      %v949 = vshll.u32 %v811, 16
      %v951 = vrot.slane %v949, 5
      %v952 = vsel %vm267, %v947, %v951
      %v953 = vshrl.u32 %v811, 16
      %v955 = vrot.slane %v953, 4
      %v956 = vor.u32 %v955, %v951
      %v957 = vrot.slane %v956, 4
      %v959 = vshll.u32 %v812, 16
      %v961 = vrot.slane %v959, 5
      %v962 = vsel %vm267, %v957, %v961
      %v964 = vshrl.u32 %v813, 16
      %v966 = vrot.slane %v964, 4
      %v967 = vshll.u32 %v813, 16
      %v969 = vrot.slane %v967, 5
      %v970 = vor.u32 %v966, %v969
      %v971 = vrot.slane %v970, 4
      %v973 = vshll.u32 %v814, 16
      %v975 = vrot.slane %v973, 5
      %v976 = vsel %vm267, %v971, %v975
      %v977 = vshrl.u32 %v814, 16
      %v979 = vrot.slane %v977, 4
      %v980 = vor.u32 %v979, %v975
      %v981 = vrot.slane %v980, 4
      %v983 = vshll.u32 %v815, 16
      %v985 = vrot.slane %v983, 5
      %v986 = vsel %vm267, %v981, %v985
      %v988 = vshrl.u32 %v816, 16
      %v990 = vrot.slane %v988, 4
      %v991 = vshll.u32 %v816, 16
      %v993 = vrot.slane %v991, 5
      %v994 = vor.u32 %v990, %v993
      %v995 = vrot.slane %v994, 4
      %v997 = vshll.u32 %v817, 16
      %v999 = vrot.slane %v997, 5
      %v1000 = vsel %vm267, %v995, %v999
      %v1001 = vshrl.u32 %v817, 16
      %v1003 = vrot.slane %v1001, 4
      %v1004 = vor.u32 %v1003, %v999
      %v1005 = vrot.slane %v1004, 4
      %v1007 = vshll.u32 %v818, 16
      %v1009 = vrot.slane %v1007, 5
      %v1010 = vsel %vm267, %v1005, %v1009
      %1011 = vrot.lane.b32.xlu0 %v832, 16
      %v1012 = vpop.permute.xlu0 %1011
      %1013 = vrot.lane.b32.xlu0 %v842, 16
      %v1014 = vpop.permute.xlu0 %1013
      %1015 = vrot.lane.b32.xlu0 %v856, 16
      %v1016 = vpop.permute.xlu0 %1015
      %1017 = vrot.lane.b32.xlu0 %v866, 16
      %v1018 = vpop.permute.xlu0 %1017
      %1019 = vrot.lane.b32.xlu0 %v880, 16
      %v1020 = vpop.permute.xlu0 %1019
      %1021 = vrot.lane.b32.xlu0 %v890, 16
      %v1022 = vpop.permute.xlu0 %1021
      %1023 = vrot.lane.b32.xlu0 %v904, 16
      %v1024 = vpop.permute.xlu0 %1023
      %1025 = vrot.lane.b32.xlu0 %v914, 16
      %v1026 = vpop.permute.xlu0 %1025
      %1027 = vrot.lane.b32.xlu0 %v928, 16
      %v1028 = vpop.permute.xlu0 %1027
      %1029 = vrot.lane.b32.xlu0 %v938, 16
      %v1030 = vpop.permute.xlu0 %1029
      %1031 = vrot.lane.b32.xlu0 %v952, 16
      %v1032 = vpop.permute.xlu0 %1031
      %1033 = vrot.lane.b32.xlu0 %v962, 16
      %v1034 = vpop.permute.xlu0 %1033
      %1035 = vrot.lane.b32.xlu0 %v976, 16
      %v1036 = vpop.permute.xlu0 %1035
      %1037 = vrot.lane.b32.xlu0 %v986, 16
      %v1038 = vpop.permute.xlu0 %1037
      %1039 = vrot.lane.b32.xlu0 %v1000, 16
      %v1040 = vpop.permute.xlu0 %1039
      %1041 = vrot.lane.b32.xlu0 %v1010, 16
      %v1042 = vpop.permute.xlu0 %1041
      %vm1059 = vcmask 158848
      %1060 = vst.msk [vmem:[#allocation2] sm:$0xf] %vm1059, %v1012
      %1061 = vst.msk [vmem:[#allocation2 + $0x4] sm:$0xf] %vm1059, %v1014
      %1062 = vst.msk [vmem:[#allocation2 + $0x8] sm:$0xf] %vm1059, %v1016
      %1063 = vst.msk [vmem:[#allocation2 + $0xc] sm:$0xf] %vm1059, %v1018
      %1064 = vst.msk [vmem:[#allocation2 + $0x10] sm:$0xf] %vm1059, %v1020
      %1065 = vst.msk [vmem:[#allocation2 + $0x14] sm:$0xf] %vm1059, %v1022
      %1066 = vst.msk [vmem:[#allocation2 + $0x18] sm:$0xf] %vm1059, %v1024
      %1067 = vst.msk [vmem:[#allocation2 + $0x1c] sm:$0xf] %vm1059, %v1026
      %1068 = vst.msk [vmem:[#allocation2 + $0x20] sm:$0xf] %vm1059, %v1028
      %1069 = vst.msk [vmem:[#allocation2 + $0x24] sm:$0xf] %vm1059, %v1030
      %1070 = vst.msk [vmem:[#allocation2 + $0x28] sm:$0xf] %vm1059, %v1032
      %1071 = vst.msk [vmem:[#allocation2 + $0x2c] sm:$0xf] %vm1059, %v1034
      %1072 = vst.msk [vmem:[#allocation2 + $0x30] sm:$0xf] %vm1059, %v1036
      %1073 = vst.msk [vmem:[#allocation2 + $0x34] sm:$0xf] %vm1059, %v1038
      %1074 = vst.msk [vmem:[#allocation2 + $0x38] sm:$0xf] %vm1059, %v1040
      %1075 = vst.msk [vmem:[#allocation2 + $0x3c] sm:$0xf] %vm1059, %v1042
      %v1076 = vld [vmem:[%s697] sm:$0xe]
      %v1077 = vld [vmem:[%s697 + $0x4] sm:$0xf]
      %v1078 = vld [vmem:[%s697 + $0x8] sm:$0x1]
      %v1079 = vld [vmem:[%s697 + $0xc] sm:$0xe]
      %v1080 = vld [vmem:[%s697 + $0x10] sm:$0xf]
      %v1081 = vld [vmem:[%s697 + $0x14] sm:$0x1]
      %v1082 = vld [vmem:[%s697 + $0x18] sm:$0xe]
      %v1083 = vld [vmem:[%s697 + $0x1c] sm:$0xf]
      %v1084 = vld [vmem:[%s697 + $0x20] sm:$0x1]
      %v1085 = vld [vmem:[%s697 + $0x24] sm:$0xe]
      %v1086 = vld [vmem:[%s697 + $0x28] sm:$0xf]
      %v1087 = vld [vmem:[%s697 + $0x2c] sm:$0x1]
      %v1088 = vld [vmem:[%s697 + $0x30] sm:$0xe]
      %v1089 = vld [vmem:[%s697 + $0x34] sm:$0xf]
      %v1090 = vld [vmem:[%s697 + $0x38] sm:$0x1]
      %v1091 = vld [vmem:[%s697 + $0x3c] sm:$0xe]
      %v1092 = vld [vmem:[%s697 + $0x40] sm:$0xf]
      %v1093 = vld [vmem:[%s697 + $0x44] sm:$0x1]
      %v1094 = vld [vmem:[%s697 + $0x48] sm:$0xe]
      %v1095 = vld [vmem:[%s697 + $0x4c] sm:$0xf]
      %v1096 = vld [vmem:[%s697 + $0x50] sm:$0x1]
      %v1097 = vld [vmem:[%s697 + $0x54] sm:$0xe]
      %v1098 = vld [vmem:[%s697 + $0x58] sm:$0xf]
      %v1099 = vld [vmem:[%s697 + $0x5c] sm:$0x1]
      %v1124 = vrot.slane %v1076, 5
      %v1125 = vrot.slane %v1124, 4
      %v1126 = vrot.slane %v1077, 5
      %v1127 = vsel %vm575, %v1125, %v1126
      %v1128 = vrot.slane %v1126, 4
      %v1129 = vrot.slane %v1078, 5
      %v1130 = vsel %vm575, %v1128, %v1129
      %v1131 = vrot.slane %v1079, 5
      %v1132 = vrot.slane %v1131, 4
      %v1133 = vrot.slane %v1080, 5
      %v1134 = vsel %vm575, %v1132, %v1133
      %v1135 = vrot.slane %v1133, 4
      %v1136 = vrot.slane %v1081, 5
      %v1137 = vsel %vm575, %v1135, %v1136
      %v1138 = vrot.slane %v1082, 5
      %v1139 = vrot.slane %v1138, 4
      %v1140 = vrot.slane %v1083, 5
      %v1141 = vsel %vm575, %v1139, %v1140
      %v1142 = vrot.slane %v1140, 4
      %v1143 = vrot.slane %v1084, 5
      %v1144 = vsel %vm575, %v1142, %v1143
      %v1145 = vrot.slane %v1085, 5
      %v1146 = vrot.slane %v1145, 4
      %v1147 = vrot.slane %v1086, 5
      %v1148 = vsel %vm575, %v1146, %v1147
      %v1149 = vrot.slane %v1147, 4
      %v1150 = vrot.slane %v1087, 5
      %v1151 = vsel %vm575, %v1149, %v1150
      %v1152 = vrot.slane %v1088, 5
      %v1153 = vrot.slane %v1152, 4
      %v1154 = vrot.slane %v1089, 5
      %v1155 = vsel %vm575, %v1153, %v1154
      %v1156 = vrot.slane %v1154, 4
      %v1157 = vrot.slane %v1090, 5
      %v1158 = vsel %vm575, %v1156, %v1157
      %v1159 = vrot.slane %v1091, 5
      %v1160 = vrot.slane %v1159, 4
      %v1161 = vrot.slane %v1092, 5
      %v1162 = vsel %vm575, %v1160, %v1161
      %v1163 = vrot.slane %v1161, 4
      %v1164 = vrot.slane %v1093, 5
      %v1165 = vsel %vm575, %v1163, %v1164
      %v1166 = vrot.slane %v1094, 5
      %v1167 = vrot.slane %v1166, 4
      %v1168 = vrot.slane %v1095, 5
      %v1169 = vsel %vm575, %v1167, %v1168
      %v1170 = vrot.slane %v1168, 4
      %v1171 = vrot.slane %v1096, 5
      %v1172 = vsel %vm575, %v1170, %v1171
      %v1173 = vrot.slane %v1097, 5
      %v1174 = vrot.slane %v1173, 4
      %v1175 = vrot.slane %v1098, 5
      %v1176 = vsel %vm575, %v1174, %v1175
      %v1177 = vrot.slane %v1175, 4
      %v1178 = vrot.slane %v1099, 5
      %v1179 = vsel %vm575, %v1177, %v1178
      %1180 = vrot.lane.b32.xlu0 %v1127, 20
      %v1181 = vpop.permute.xlu0 %1180
      %1182 = vrot.lane.b32.xlu0 %v1130, 20
      %v1183 = vpop.permute.xlu0 %1182
      %1184 = vrot.lane.b32.xlu0 %v1134, 20
      %v1185 = vpop.permute.xlu0 %1184
      %1186 = vrot.lane.b32.xlu0 %v1137, 20
      %v1187 = vpop.permute.xlu0 %1186
      %1188 = vrot.lane.b32.xlu0 %v1141, 20
      %v1189 = vpop.permute.xlu0 %1188
      %1190 = vrot.lane.b32.xlu0 %v1144, 20
      %v1191 = vpop.permute.xlu0 %1190
      %1192 = vrot.lane.b32.xlu0 %v1148, 20
      %v1193 = vpop.permute.xlu0 %1192
      %1194 = vrot.lane.b32.xlu0 %v1151, 20
      %v1195 = vpop.permute.xlu0 %1194
      %1196 = vrot.lane.b32.xlu0 %v1155, 20
      %v1197 = vpop.permute.xlu0 %1196
      %1198 = vrot.lane.b32.xlu0 %v1158, 20
      %v1199 = vpop.permute.xlu0 %1198
      %1200 = vrot.lane.b32.xlu0 %v1162, 20
      %v1201 = vpop.permute.xlu0 %1200
      %1202 = vrot.lane.b32.xlu0 %v1165, 20
      %v1203 = vpop.permute.xlu0 %1202
      %1204 = vrot.lane.b32.xlu0 %v1169, 20
      %v1205 = vpop.permute.xlu0 %1204
      %1206 = vrot.lane.b32.xlu0 %v1172, 20
      %v1207 = vpop.permute.xlu0 %1206
      %1208 = vrot.lane.b32.xlu0 %v1176, 20
      %v1209 = vpop.permute.xlu0 %1208
      %1210 = vrot.lane.b32.xlu0 %v1179, 20
      %v1211 = vpop.permute.xlu0 %1210
      %vm1228 = vcmask 191648
      %1229 = vst.msk [vmem:[#allocation2] sm:$0xf] %vm1228, %v1181
      %1230 = vst.msk [vmem:[#allocation2 + $0x4] sm:$0xf] %vm1228, %v1183
      %1231 = vst.msk [vmem:[#allocation2 + $0x8] sm:$0xf] %vm1228, %v1185
      %1232 = vst.msk [vmem:[#allocation2 + $0xc] sm:$0xf] %vm1228, %v1187
      %1233 = vst.msk [vmem:[#allocation2 + $0x10] sm:$0xf] %vm1228, %v1189
      %1234 = vst.msk [vmem:[#allocation2 + $0x14] sm:$0xf] %vm1228, %v1191
      %1235 = vst.msk [vmem:[#allocation2 + $0x18] sm:$0xf] %vm1228, %v1193
      %1236 = vst.msk [vmem:[#allocation2 + $0x1c] sm:$0xf] %vm1228, %v1195
      %1237 = vst.msk [vmem:[#allocation2 + $0x20] sm:$0xf] %vm1228, %v1197
      %1238 = vst.msk [vmem:[#allocation2 + $0x24] sm:$0xf] %vm1228, %v1199
      %1239 = vst.msk [vmem:[#allocation2 + $0x28] sm:$0xf] %vm1228, %v1201
      %1240 = vst.msk [vmem:[#allocation2 + $0x2c] sm:$0xf] %vm1228, %v1203
      %1241 = vst.msk [vmem:[#allocation2 + $0x30] sm:$0xf] %vm1228, %v1205
      %1242 = vst.msk [vmem:[#allocation2 + $0x34] sm:$0xf] %vm1228, %v1207
      %1243 = vst.msk [vmem:[#allocation2 + $0x38] sm:$0xf] %vm1228, %v1209
      %1244 = vst.msk [vmem:[#allocation2 + $0x3c] sm:$0xf] %vm1228, %v1211
      %s1245 = scalar_lea.vmem %s195, 24
      %v1246 = vld [vmem:[%s1245] sm:$0xf]
      %v1247 = vld [vmem:[%s1245 + $0x4] sm:$0xf]
      %v1248 = vld [vmem:[%s1245 + $0xc] sm:$0xf]
      %v1249 = vld [vmem:[%s1245 + $0x10] sm:$0xf]
      %v1250 = vld [vmem:[%s1245 + $0x18] sm:$0xf]
      %v1251 = vld [vmem:[%s1245 + $0x1c] sm:$0xf]
      %v1252 = vld [vmem:[%s1245 + $0x24] sm:$0xf]
      %v1253 = vld [vmem:[%s1245 + $0x28] sm:$0xf]
      %v1254 = vld [vmem:[%s1245 + $0x30] sm:$0xf]
      %v1255 = vld [vmem:[%s1245 + $0x34] sm:$0xf]
      %v1256 = vld [vmem:[%s1245 + $0x3c] sm:$0xf]
      %v1257 = vld [vmem:[%s1245 + $0x40] sm:$0xf]
      %v1258 = vld [vmem:[%s1245 + $0x48] sm:$0xf]
      %v1259 = vld [vmem:[%s1245 + $0x4c] sm:$0xf]
      %v1260 = vld [vmem:[%s1245 + $0x54] sm:$0xf]
      %v1261 = vld [vmem:[%s1245 + $0x58] sm:$0xf]
      %1278 = vrot.lane.b32.xlu0 %v1246, 24
      %v1279 = vpop.permute.xlu0 %1278
      %1280 = vrot.lane.b32.xlu0 %v1247, 24
      %v1281 = vpop.permute.xlu0 %1280
      %1282 = vrot.lane.b32.xlu0 %v1248, 24
      %v1283 = vpop.permute.xlu0 %1282
      %1284 = vrot.lane.b32.xlu0 %v1249, 24
      %v1285 = vpop.permute.xlu0 %1284
      %1286 = vrot.lane.b32.xlu0 %v1250, 24
      %v1287 = vpop.permute.xlu0 %1286
      %1288 = vrot.lane.b32.xlu0 %v1251, 24
      %v1289 = vpop.permute.xlu0 %1288
      %1290 = vrot.lane.b32.xlu0 %v1252, 24
      %v1291 = vpop.permute.xlu0 %1290
      %1292 = vrot.lane.b32.xlu0 %v1253, 24
      %v1293 = vpop.permute.xlu0 %1292
      %1294 = vrot.lane.b32.xlu0 %v1254, 24
      %v1295 = vpop.permute.xlu0 %1294
      %1296 = vrot.lane.b32.xlu0 %v1255, 24
      %v1297 = vpop.permute.xlu0 %1296
      %1298 = vrot.lane.b32.xlu0 %v1256, 24
      %v1299 = vpop.permute.xlu0 %1298
      %1300 = vrot.lane.b32.xlu0 %v1257, 24
      %v1301 = vpop.permute.xlu0 %1300
      %1302 = vrot.lane.b32.xlu0 %v1258, 24
      %v1303 = vpop.permute.xlu0 %1302
      %1304 = vrot.lane.b32.xlu0 %v1259, 24
      %v1305 = vpop.permute.xlu0 %1304
      %1306 = vrot.lane.b32.xlu0 %v1260, 24
      %v1307 = vpop.permute.xlu0 %1306
      %1308 = vrot.lane.b32.xlu0 %v1261, 24
      %v1309 = vpop.permute.xlu0 %1308
      %vm1326 = vcmask 224448
      %1327 = vst.msk [vmem:[#allocation2] sm:$0xf] %vm1326, %v1279
      %1328 = vst.msk [vmem:[#allocation2 + $0x4] sm:$0xf] %vm1326, %v1281
      %1329 = vst.msk [vmem:[#allocation2 + $0x8] sm:$0xf] %vm1326, %v1283
      %1330 = vst.msk [vmem:[#allocation2 + $0xc] sm:$0xf] %vm1326, %v1285
      %1331 = vst.msk [vmem:[#allocation2 + $0x10] sm:$0xf] %vm1326, %v1287
      %1332 = vst.msk [vmem:[#allocation2 + $0x14] sm:$0xf] %vm1326, %v1289
      %1333 = vst.msk [vmem:[#allocation2 + $0x18] sm:$0xf] %vm1326, %v1291
      %1334 = vst.msk [vmem:[#allocation2 + $0x1c] sm:$0xf] %vm1326, %v1293
      %1335 = vst.msk [vmem:[#allocation2 + $0x20] sm:$0xf] %vm1326, %v1295
      %1336 = vst.msk [vmem:[#allocation2 + $0x24] sm:$0xf] %vm1326, %v1297
      %1337 = vst.msk [vmem:[#allocation2 + $0x28] sm:$0xf] %vm1326, %v1299
      %1338 = vst.msk [vmem:[#allocation2 + $0x2c] sm:$0xf] %vm1326, %v1301
      %1339 = vst.msk [vmem:[#allocation2 + $0x30] sm:$0xf] %vm1326, %v1303
      %1340 = vst.msk [vmem:[#allocation2 + $0x34] sm:$0xf] %vm1326, %v1305
      %1341 = vst.msk [vmem:[#allocation2 + $0x38] sm:$0xf] %vm1326, %v1307
      %1342 = vst.msk [vmem:[#allocation2 + $0x3c] sm:$0xf] %vm1326, %v1309
      %v1343 = vld [vmem:[%s1245] sm:$0xf]
      %v1344 = vld [vmem:[%s1245 + $0x4] sm:$0xf]
      %v1345 = vld [vmem:[%s1245 + $0x8] sm:$0x1]
      %v1346 = vld [vmem:[%s1245 + $0xc] sm:$0xf]
      %v1347 = vld [vmem:[%s1245 + $0x10] sm:$0xf]
      %v1348 = vld [vmem:[%s1245 + $0x14] sm:$0x1]
      %v1349 = vld [vmem:[%s1245 + $0x18] sm:$0xf]
      %v1350 = vld [vmem:[%s1245 + $0x1c] sm:$0xf]
      %v1351 = vld [vmem:[%s1245 + $0x20] sm:$0x1]
      %v1352 = vld [vmem:[%s1245 + $0x24] sm:$0xf]
      %v1353 = vld [vmem:[%s1245 + $0x28] sm:$0xf]
      %v1354 = vld [vmem:[%s1245 + $0x2c] sm:$0x1]
      %v1355 = vld [vmem:[%s1245 + $0x30] sm:$0xf]
      %v1356 = vld [vmem:[%s1245 + $0x34] sm:$0xf]
      %v1357 = vld [vmem:[%s1245 + $0x38] sm:$0x1]
      %v1358 = vld [vmem:[%s1245 + $0x3c] sm:$0xf]
      %v1359 = vld [vmem:[%s1245 + $0x40] sm:$0xf]
      %v1360 = vld [vmem:[%s1245 + $0x44] sm:$0x1]
      %v1361 = vld [vmem:[%s1245 + $0x48] sm:$0xf]
      %v1362 = vld [vmem:[%s1245 + $0x4c] sm:$0xf]
      %v1363 = vld [vmem:[%s1245 + $0x50] sm:$0x1]
      %v1364 = vld [vmem:[%s1245 + $0x54] sm:$0xf]
      %v1365 = vld [vmem:[%s1245 + $0x58] sm:$0xf]
      %v1366 = vld [vmem:[%s1245 + $0x5c] sm:$0x1]
      %v1368 = vshrl.u32 %v1343, 16
      %v1370 = vrot.slane %v1368, 4
      %v1371 = vshll.u32 %v1343, 16
      %v1373 = vrot.slane %v1371, 5
      %v1374 = vor.u32 %v1370, %v1373
      %v1375 = vrot.slane %v1374, 4
      %v1377 = vshll.u32 %v1344, 16
      %v1379 = vrot.slane %v1377, 5
      %v1380 = vsel %vm267, %v1375, %v1379
      %v1381 = vshrl.u32 %v1344, 16
      %v1383 = vrot.slane %v1381, 4
      %v1384 = vor.u32 %v1383, %v1379
      %v1385 = vrot.slane %v1384, 4
      %v1387 = vshll.u32 %v1345, 16
      %v1389 = vrot.slane %v1387, 5
      %v1390 = vsel %vm267, %v1385, %v1389
      %v1392 = vshrl.u32 %v1346, 16
      %v1394 = vrot.slane %v1392, 4
      %v1395 = vshll.u32 %v1346, 16
      %v1397 = vrot.slane %v1395, 5
      %v1398 = vor.u32 %v1394, %v1397
      %v1399 = vrot.slane %v1398, 4
      %v1401 = vshll.u32 %v1347, 16
      %v1403 = vrot.slane %v1401, 5
      %v1404 = vsel %vm267, %v1399, %v1403
      %v1405 = vshrl.u32 %v1347, 16
      %v1407 = vrot.slane %v1405, 4
      %v1408 = vor.u32 %v1407, %v1403
      %v1409 = vrot.slane %v1408, 4
      %v1411 = vshll.u32 %v1348, 16
      %v1413 = vrot.slane %v1411, 5
      %v1414 = vsel %vm267, %v1409, %v1413
      %v1416 = vshrl.u32 %v1349, 16
      %v1418 = vrot.slane %v1416, 4
      %v1419 = vshll.u32 %v1349, 16
      %v1421 = vrot.slane %v1419, 5
      %v1422 = vor.u32 %v1418, %v1421
      %v1423 = vrot.slane %v1422, 4
      %v1425 = vshll.u32 %v1350, 16
      %v1427 = vrot.slane %v1425, 5
      %v1428 = vsel %vm267, %v1423, %v1427
      %v1429 = vshrl.u32 %v1350, 16
      %v1431 = vrot.slane %v1429, 4
      %v1432 = vor.u32 %v1431, %v1427
      %v1433 = vrot.slane %v1432, 4
      %v1435 = vshll.u32 %v1351, 16
      %v1437 = vrot.slane %v1435, 5
      %v1438 = vsel %vm267, %v1433, %v1437
      %v1440 = vshrl.u32 %v1352, 16
      %v1442 = vrot.slane %v1440, 4
      %v1443 = vshll.u32 %v1352, 16
      %v1445 = vrot.slane %v1443, 5
      %v1446 = vor.u32 %v1442, %v1445
      %v1447 = vrot.slane %v1446, 4
      %v1449 = vshll.u32 %v1353, 16
      %v1451 = vrot.slane %v1449, 5
      %v1452 = vsel %vm267, %v1447, %v1451
      %v1453 = vshrl.u32 %v1353, 16
      %v1455 = vrot.slane %v1453, 4
      %v1456 = vor.u32 %v1455, %v1451
      %v1457 = vrot.slane %v1456, 4
      %v1459 = vshll.u32 %v1354, 16
      %v1461 = vrot.slane %v1459, 5
      %v1462 = vsel %vm267, %v1457, %v1461
      %v1464 = vshrl.u32 %v1355, 16
      %v1466 = vrot.slane %v1464, 4
      %v1467 = vshll.u32 %v1355, 16
      %v1469 = vrot.slane %v1467, 5
      %v1470 = vor.u32 %v1466, %v1469
      %v1471 = vrot.slane %v1470, 4
      %v1473 = vshll.u32 %v1356, 16
      %v1475 = vrot.slane %v1473, 5
      %v1476 = vsel %vm267, %v1471, %v1475
      %v1477 = vshrl.u32 %v1356, 16
      %v1479 = vrot.slane %v1477, 4
      %v1480 = vor.u32 %v1479, %v1475
      %v1481 = vrot.slane %v1480, 4
      %v1483 = vshll.u32 %v1357, 16
      %v1485 = vrot.slane %v1483, 5
      %v1486 = vsel %vm267, %v1481, %v1485
      %v1488 = vshrl.u32 %v1358, 16
      %v1490 = vrot.slane %v1488, 4
      %v1491 = vshll.u32 %v1358, 16
      %v1493 = vrot.slane %v1491, 5
      %v1494 = vor.u32 %v1490, %v1493
      %v1495 = vrot.slane %v1494, 4
      %v1497 = vshll.u32 %v1359, 16
      %v1499 = vrot.slane %v1497, 5
      %v1500 = vsel %vm267, %v1495, %v1499
      %v1501 = vshrl.u32 %v1359, 16
      %v1503 = vrot.slane %v1501, 4
      %v1504 = vor.u32 %v1503, %v1499
      %v1505 = vrot.slane %v1504, 4
      %v1507 = vshll.u32 %v1360, 16
      %v1509 = vrot.slane %v1507, 5
      %v1510 = vsel %vm267, %v1505, %v1509
      %v1512 = vshrl.u32 %v1361, 16
      %v1514 = vrot.slane %v1512, 4
      %v1515 = vshll.u32 %v1361, 16
      %v1517 = vrot.slane %v1515, 5
      %v1518 = vor.u32 %v1514, %v1517
      %v1519 = vrot.slane %v1518, 4
      %v1521 = vshll.u32 %v1362, 16
      %v1523 = vrot.slane %v1521, 5
      %v1524 = vsel %vm267, %v1519, %v1523
      %v1525 = vshrl.u32 %v1362, 16
      %v1527 = vrot.slane %v1525, 4
      %v1528 = vor.u32 %v1527, %v1523
      %v1529 = vrot.slane %v1528, 4
      %v1531 = vshll.u32 %v1363, 16
      %v1533 = vrot.slane %v1531, 5
      %v1534 = vsel %vm267, %v1529, %v1533
      %v1536 = vshrl.u32 %v1364, 16
      %v1538 = vrot.slane %v1536, 4
      %v1539 = vshll.u32 %v1364, 16
      %v1541 = vrot.slane %v1539, 5
      %v1542 = vor.u32 %v1538, %v1541
      %v1543 = vrot.slane %v1542, 4
      %v1545 = vshll.u32 %v1365, 16
      %v1547 = vrot.slane %v1545, 5
      %v1548 = vsel %vm267, %v1543, %v1547
      %v1549 = vshrl.u32 %v1365, 16
      %v1551 = vrot.slane %v1549, 4
      %v1552 = vor.u32 %v1551, %v1547
      %v1553 = vrot.slane %v1552, 4
      %v1555 = vshll.u32 %v1366, 16
      %v1557 = vrot.slane %v1555, 5
      %v1558 = vsel %vm267, %v1553, %v1557
      %1559 = vrot.lane.b32.xlu0 %v1380, 28
      %v1560 = vpop.permute.xlu0 %1559
      %1561 = vrot.lane.b32.xlu0 %v1390, 28
      %v1562 = vpop.permute.xlu0 %1561
      %1563 = vrot.lane.b32.xlu0 %v1404, 28
      %v1564 = vpop.permute.xlu0 %1563
      %1565 = vrot.lane.b32.xlu0 %v1414, 28
      %v1566 = vpop.permute.xlu0 %1565
      %1567 = vrot.lane.b32.xlu0 %v1428, 28
      %v1568 = vpop.permute.xlu0 %1567
      %1569 = vrot.lane.b32.xlu0 %v1438, 28
      %v1570 = vpop.permute.xlu0 %1569
      %1571 = vrot.lane.b32.xlu0 %v1452, 28
      %v1572 = vpop.permute.xlu0 %1571
      %1573 = vrot.lane.b32.xlu0 %v1462, 28
      %v1574 = vpop.permute.xlu0 %1573
      %1575 = vrot.lane.b32.xlu0 %v1476, 28
      %v1576 = vpop.permute.xlu0 %1575
      %1577 = vrot.lane.b32.xlu0 %v1486, 28
      %v1578 = vpop.permute.xlu0 %1577
      %1579 = vrot.lane.b32.xlu0 %v1500, 28
      %v1580 = vpop.permute.xlu0 %1579
      %1581 = vrot.lane.b32.xlu0 %v1510, 28
      %v1582 = vpop.permute.xlu0 %1581
      %1583 = vrot.lane.b32.xlu0 %v1524, 28
      %v1584 = vpop.permute.xlu0 %1583
      %1585 = vrot.lane.b32.xlu0 %v1534, 28
      %v1586 = vpop.permute.xlu0 %1585
      %1587 = vrot.lane.b32.xlu0 %v1548, 28
      %v1588 = vpop.permute.xlu0 %1587
      %1589 = vrot.lane.b32.xlu0 %v1558, 28
      %v1590 = vpop.permute.xlu0 %1589
      %vm1607 = vcmask 257248
      %1608 = vst.msk [vmem:[#allocation2] sm:$0xf] %vm1607, %v1560
      %1609 = vst.msk [vmem:[#allocation2 + $0x4] sm:$0xf] %vm1607, %v1562
      %1610 = vst.msk [vmem:[#allocation2 + $0x8] sm:$0xf] %vm1607, %v1564
      %1611 = vst.msk [vmem:[#allocation2 + $0xc] sm:$0xf] %vm1607, %v1566
      %1612 = vst.msk [vmem:[#allocation2 + $0x10] sm:$0xf] %vm1607, %v1568
      %1613 = vst.msk [vmem:[#allocation2 + $0x14] sm:$0xf] %vm1607, %v1570
      %1614 = vst.msk [vmem:[#allocation2 + $0x18] sm:$0xf] %vm1607, %v1572
      %1615 = vst.msk [vmem:[#allocation2 + $0x1c] sm:$0xf] %vm1607, %v1574
      %1616 = vst.msk [vmem:[#allocation2 + $0x20] sm:$0xf] %vm1607, %v1576
      %1617 = vst.msk [vmem:[#allocation2 + $0x24] sm:$0xf] %vm1607, %v1578
      %1618 = vst.msk [vmem:[#allocation2 + $0x28] sm:$0xf] %vm1607, %v1580
      %1619 = vst.msk [vmem:[#allocation2 + $0x2c] sm:$0xf] %vm1607, %v1582
      %1620 = vst.msk [vmem:[#allocation2 + $0x30] sm:$0xf] %vm1607, %v1584
      %1621 = vst.msk [vmem:[#allocation2 + $0x34] sm:$0xf] %vm1607, %v1586
      %1622 = vst.msk [vmem:[#allocation2 + $0x38] sm:$0xf] %vm1607, %v1588
      %1623 = vst.msk [vmem:[#allocation2 + $0x3c] sm:$0xf] %vm1607, %v1590
      %v1624 = vld [vmem:[%s1245] sm:$0xe]
      %v1625 = vld [vmem:[%s1245 + $0x4] sm:$0xf]
      %v1626 = vld [vmem:[%s1245 + $0x8] sm:$0x1]
      %v1627 = vld [vmem:[%s1245 + $0xc] sm:$0xe]
      %v1628 = vld [vmem:[%s1245 + $0x10] sm:$0xf]
      %v1629 = vld [vmem:[%s1245 + $0x14] sm:$0x1]
      %v1630 = vld [vmem:[%s1245 + $0x18] sm:$0xe]
      %v1631 = vld [vmem:[%s1245 + $0x1c] sm:$0xf]
      %v1632 = vld [vmem:[%s1245 + $0x20] sm:$0x1]
      %v1633 = vld [vmem:[%s1245 + $0x24] sm:$0xe]
      %v1634 = vld [vmem:[%s1245 + $0x28] sm:$0xf]
      %v1635 = vld [vmem:[%s1245 + $0x2c] sm:$0x1]
      %v1636 = vld [vmem:[%s1245 + $0x30] sm:$0xe]
      %v1637 = vld [vmem:[%s1245 + $0x34] sm:$0xf]
      %v1638 = vld [vmem:[%s1245 + $0x38] sm:$0x1]
      %v1639 = vld [vmem:[%s1245 + $0x3c] sm:$0xe]
      %v1640 = vld [vmem:[%s1245 + $0x40] sm:$0xf]
      %v1641 = vld [vmem:[%s1245 + $0x44] sm:$0x1]
      %v1642 = vld [vmem:[%s1245 + $0x48] sm:$0xe]
      %v1643 = vld [vmem:[%s1245 + $0x4c] sm:$0xf]
      %v1644 = vld [vmem:[%s1245 + $0x50] sm:$0x1]
      %v1645 = vld [vmem:[%s1245 + $0x54] sm:$0xe]
      %v1646 = vld [vmem:[%s1245 + $0x58] sm:$0xf]
      %v1647 = vld [vmem:[%s1245 + $0x5c] sm:$0x1]
      %v1672 = vrot.slane %v1624, 5
      %v1673 = vrot.slane %v1672, 4
      %v1674 = vrot.slane %v1625, 5
      %v1675 = vsel %vm575, %v1673, %v1674
      %v1676 = vrot.slane %v1674, 4
      %v1677 = vrot.slane %v1626, 5
      %v1678 = vsel %vm575, %v1676, %v1677
      %v1679 = vrot.slane %v1627, 5
      %v1680 = vrot.slane %v1679, 4
      %v1681 = vrot.slane %v1628, 5
      %v1682 = vsel %vm575, %v1680, %v1681
      %v1683 = vrot.slane %v1681, 4
      %v1684 = vrot.slane %v1629, 5
      %v1685 = vsel %vm575, %v1683, %v1684
      %v1686 = vrot.slane %v1630, 5
      %v1687 = vrot.slane %v1686, 4
      %v1688 = vrot.slane %v1631, 5
      %v1689 = vsel %vm575, %v1687, %v1688
      %v1690 = vrot.slane %v1688, 4
      %v1691 = vrot.slane %v1632, 5
      %v1692 = vsel %vm575, %v1690, %v1691
      %v1693 = vrot.slane %v1633, 5
      %v1694 = vrot.slane %v1693, 4
      %v1695 = vrot.slane %v1634, 5
      %v1696 = vsel %vm575, %v1694, %v1695
      %v1697 = vrot.slane %v1695, 4
      %v1698 = vrot.slane %v1635, 5
      %v1699 = vsel %vm575, %v1697, %v1698
      %v1700 = vrot.slane %v1636, 5
      %v1701 = vrot.slane %v1700, 4
      %v1702 = vrot.slane %v1637, 5
      %v1703 = vsel %vm575, %v1701, %v1702
      %v1704 = vrot.slane %v1702, 4
      %v1705 = vrot.slane %v1638, 5
      %v1706 = vsel %vm575, %v1704, %v1705
      %v1707 = vrot.slane %v1639, 5
      %v1708 = vrot.slane %v1707, 4
      %v1709 = vrot.slane %v1640, 5
      %v1710 = vsel %vm575, %v1708, %v1709
      %v1711 = vrot.slane %v1709, 4
      %v1712 = vrot.slane %v1641, 5
      %v1713 = vsel %vm575, %v1711, %v1712
      %v1714 = vrot.slane %v1642, 5
      %v1715 = vrot.slane %v1714, 4
      %v1716 = vrot.slane %v1643, 5
      %v1717 = vsel %vm575, %v1715, %v1716
      %v1718 = vrot.slane %v1716, 4
      %v1719 = vrot.slane %v1644, 5
      %v1720 = vsel %vm575, %v1718, %v1719
      %v1721 = vrot.slane %v1645, 5
      %v1722 = vrot.slane %v1721, 4
      %v1723 = vrot.slane %v1646, 5
      %v1724 = vsel %vm575, %v1722, %v1723
      %v1725 = vrot.slane %v1723, 4
      %v1726 = vrot.slane %v1647, 5
      %v1727 = vsel %vm575, %v1725, %v1726
      %1728 = vrot.lane.b32.xlu0 %v1675, 32
      %v1729 = vpop.permute.xlu0 %1728
      %1730 = vrot.lane.b32.xlu0 %v1678, 32
      %v1731 = vpop.permute.xlu0 %1730
      %1732 = vrot.lane.b32.xlu0 %v1682, 32
      %v1733 = vpop.permute.xlu0 %1732
      %1734 = vrot.lane.b32.xlu0 %v1685, 32
      %v1735 = vpop.permute.xlu0 %1734
      %1736 = vrot.lane.b32.xlu0 %v1689, 32
      %v1737 = vpop.permute.xlu0 %1736
      %1738 = vrot.lane.b32.xlu0 %v1692, 32
      %v1739 = vpop.permute.xlu0 %1738
      %1740 = vrot.lane.b32.xlu0 %v1696, 32
      %v1741 = vpop.permute.xlu0 %1740
      %1742 = vrot.lane.b32.xlu0 %v1699, 32
      %v1743 = vpop.permute.xlu0 %1742
      %1744 = vrot.lane.b32.xlu0 %v1703, 32
      %v1745 = vpop.permute.xlu0 %1744
      %1746 = vrot.lane.b32.xlu0 %v1706, 32
      %v1747 = vpop.permute.xlu0 %1746
      %1748 = vrot.lane.b32.xlu0 %v1710, 32
      %v1749 = vpop.permute.xlu0 %1748
      %1750 = vrot.lane.b32.xlu0 %v1713, 32
      %v1751 = vpop.permute.xlu0 %1750
      %1752 = vrot.lane.b32.xlu0 %v1717, 32
      %v1753 = vpop.permute.xlu0 %1752
      %1754 = vrot.lane.b32.xlu0 %v1720, 32
      %v1755 = vpop.permute.xlu0 %1754
      %1756 = vrot.lane.b32.xlu0 %v1724, 32
      %v1757 = vpop.permute.xlu0 %1756
      %1758 = vrot.lane.b32.xlu0 %v1727, 32
      %v1759 = vpop.permute.xlu0 %1758
      %vm1776 = vcmask 290048
      %1777 = vst.msk [vmem:[#allocation2] sm:$0xf] %vm1776, %v1729
      %1778 = vst.msk [vmem:[#allocation2 + $0x4] sm:$0xf] %vm1776, %v1731
      %1779 = vst.msk [vmem:[#allocation2 + $0x8] sm:$0xf] %vm1776, %v1733
      %1780 = vst.msk [vmem:[#allocation2 + $0xc] sm:$0xf] %vm1776, %v1735
      %1781 = vst.msk [vmem:[#allocation2 + $0x10] sm:$0xf] %vm1776, %v1737
      %1782 = vst.msk [vmem:[#allocation2 + $0x14] sm:$0xf] %vm1776, %v1739
      %1783 = vst.msk [vmem:[#allocation2 + $0x18] sm:$0xf] %vm1776, %v1741
      %1784 = vst.msk [vmem:[#allocation2 + $0x1c] sm:$0xf] %vm1776, %v1743
      %1785 = vst.msk [vmem:[#allocation2 + $0x20] sm:$0xf] %vm1776, %v1745
      %1786 = vst.msk [vmem:[#allocation2 + $0x24] sm:$0xf] %vm1776, %v1747
      %1787 = vst.msk [vmem:[#allocation2 + $0x28] sm:$0xf] %vm1776, %v1749
      %1788 = vst.msk [vmem:[#allocation2 + $0x2c] sm:$0xf] %vm1776, %v1751
      %1789 = vst.msk [vmem:[#allocation2 + $0x30] sm:$0xf] %vm1776, %v1753
      %1790 = vst.msk [vmem:[#allocation2 + $0x34] sm:$0xf] %vm1776, %v1755
      %1791 = vst.msk [vmem:[#allocation2 + $0x38] sm:$0xf] %vm1776, %v1757
      %1792 = vst.msk [vmem:[#allocation2 + $0x3c] sm:$0xf] %vm1776, %v1759
      %v1793 = vld [vmem:[#allocation2] sm:$0xf]
      %v1794 = vld [vmem:[#allocation2 + $0x4] sm:$0xf]
      %v1795 = vld [vmem:[#allocation2 + $0x8] sm:$0xf]
      %v1796 = vld [vmem:[#allocation2 + $0xc] sm:$0xf]
      %v1797 = vld [vmem:[#allocation2 + $0x10] sm:$0xf]
      %v1798 = vld [vmem:[#allocation2 + $0x14] sm:$0xf]
      %v1799 = vld [vmem:[#allocation2 + $0x18] sm:$0xf]
      %v1800 = vld [vmem:[#allocation2 + $0x1c] sm:$0xf]
      %v1801 = vld [vmem:[#allocation2 + $0x20] sm:$0xf]
      %v1802 = vld [vmem:[#allocation2 + $0x24] sm:$0xf]
      %v1803 = vld [vmem:[#allocation2 + $0x28] sm:$0xf]
      %v1804 = vld [vmem:[#allocation2 + $0x2c] sm:$0xf]
      %v1805 = vld [vmem:[#allocation2 + $0x30] sm:$0xf]
      %v1806 = vld [vmem:[#allocation2 + $0x34] sm:$0xf]
      %v1807 = vld [vmem:[#allocation2 + $0x38] sm:$0xf]
      %v1808 = vld [vmem:[#allocation2 + $0x3c] sm:$0xf]
      %v1809 = vld [vmem:[%s1] sm:$0xf]
      %v1810 = vld [vmem:[%s1 + $0x4] sm:$0xf]
      %v1811 = vld [vmem:[%s1 + $0x8] sm:$0xf]
      %v1812 = vld [vmem:[%s1 + $0xc] sm:$0xf]
      %v1813 = vld [vmem:[%s1 + $0x10] sm:$0x3]
      %v1814 = vld [vmem:[%s2] sm:$0x1]
      %v1816 = vlaneseq
      %v1817 = vshrl.u32 %v1816, 7
      %v1818 = vsub.s32 0, %v1817
      %v1819 = vrot.slane %v1814, %v1818
      %v1837 = vunpack.c.l.b16 %v1793
      %v1838 = vunpack.c.l.b16 %v1794
      %v1839 = vunpack.c.l.b16 %v1795
      %v1840 = vunpack.c.l.b16 %v1796
      %v1841 = vunpack.c.l.b16 %v1797
      %v1842 = vunpack.c.l.b16 %v1798
      %v1843 = vunpack.c.l.b16 %v1799
      %v1844 = vunpack.c.l.b16 %v1800
      %v1845 = vunpack.c.l.b16 %v1801
      %v1846 = vunpack.c.l.b16 %v1802
      %v1847 = vunpack.c.l.b16 %v1803
      %v1848 = vunpack.c.l.b16 %v1804
      %v1849 = vunpack.c.l.b16 %v1805
      %v1850 = vunpack.c.l.b16 %v1806
      %v1851 = vunpack.c.l.b16 %v1807
      %v1852 = vunpack.c.l.b16 %v1808
      %v1853 = vpack.c.b16 %v1838, %v1837
      %v1854 = vpack.c.b16 %v1840, %v1839
      %v1855 = vpack.c.b16 %v1842, %v1841
      %v1856 = vpack.c.b16 %v1844, %v1843
      %v1857 = vpack.c.b16 %v1846, %v1845
      %v1858 = vpack.c.b16 %v1848, %v1847
      %v1859 = vpack.c.b16 %v1850, %v1849
      %v1860 = vpack.c.b16 %v1852, %v1851
      %v1866 = vunpack.c.l.b16 %v1809
      %v1867 = vunpack.c.l.b16 %v1810
      %v1868 = vunpack.c.l.b16 %v1811
      %v1869 = vunpack.c.l.b16 %v1812
      %v1870 = vunpack.c.l.b16 %v1813
      %v1871 = vpack.c.b16 %v1867, %v1866
      %v1872 = vpack.c.b16 %v1869, %v1868
      %v1873 = vpack.c.b16 %v1870, %v1870
      %vm1876 = vcmask 293888
      %v1878 = vsel %vm1876, %v1853, 0
      %v1881 = vsel %vm1876, %v1854, 0
      %v1884 = vsel %vm1876, %v1855, 0
      %v1887 = vsel %vm1876, %v1856, 0
      %v1890 = vsel %vm1876, %v1857, 0
      %v1893 = vsel %vm1876, %v1858, 0
      %v1896 = vsel %vm1876, %v1859, 0
      %v1899 = vsel %vm1876, %v1860, 0
      %vm1901 = vcmask 1041408
      %v1903 = vsel %vm1901, %v1873, 0
      %1905 = vmatprep.subr.bf16.mxu0 0
      %1906 = vmatpush1.bf16.msra.mxu0 0
      %1907 = vmatprep.subr.bf16.mxu0 0
      %1908 = vmatpush1.bf16.msra.mxu0 0
      %1909 = vmatprep.subr.bf16.mxu0 0
      %1910 = vmatpush1.bf16.msra.mxu0 0
      %1911 = vmatprep.subr.bf16.mxu0 0
      %1912 = vmatpush1.bf16.msra.mxu0 0
      %1913 = vmatprep.subr.bf16.mxu0 0
      %1914 = vmatpush1.bf16.msra.mxu0 0
      %1915 = vmatprep.subr.bf16.mxu0 0
      %1916 = vmatpush1.bf16.msra.mxu0 %v1903
      %1917 = vmatprep.subr.bf16.mxu0 0
      %1918 = vmatpush1.bf16.msra.mxu0 %v1872
      %1919 = vmatprep.subr.bf16.mxu0 0
      %1920 = vmatpush1.bf16.msra.mxu0 %v1871
      %1921 = vmatprep.subr.bf16.mxu0 0
      %1922 = vmatpush2.bf16.msra.mxu0 0
      %1923 = vmatprep.subr.bf16.mxu0 0
      %1924 = vmatpush2.bf16.msra.mxu0 0
      %1925 = vmatprep.subr.bf16.mxu0 0
      %1926 = vmatpush2.bf16.msra.mxu0 0
      %1927 = vmatprep.subr.bf16.mxu0 0
      %1928 = vmatpush2.bf16.msra.mxu0 0
      %1929 = vmatprep.subr.bf16.mxu0 0
      %1930 = vmatpush2.bf16.msra.mxu0 0
      %1931 = vmatprep.subr.bf16.mxu0 0
      %1932 = vmatpush2.bf16.msra.mxu0 0
      %1933 = vmatprep.subr.bf16.mxu0 0
      %1934 = vmatpush2.bf16.msra.mxu0 0
      %1935 = vmatprep.subr.bf16.mxu0 0
      %1936 = vmatpush2.bf16.msra.mxu0 0
      %1937 = vmatprep.mubr.bf16.mxu0 0
      %1938 = vmatmul.mubr.bf16.gmra.mxu0 %v1878
      %v1939 = vpop.f32.mrf.mxu0
      %v1940 = vadd.f32 %v1819, %v1939
      %v1941 = vpop.f32.mrf.mxu0
      %v1942 = vpop.f32.mrf.mxu0
      %v1943 = vadd.f32 %v1819, %v1942
      %v1944 = vpop.f32.mrf.mxu0
      %1945 = vmatprep.mubr.bf16.mxu0 0
      %1946 = vmatmul.mubr.bf16.gmra.mxu0 %v1881
      %v1947 = vpop.f32.mrf.mxu0
      %v1948 = vadd.f32 %v1819, %v1947
      %v1949 = vpop.f32.mrf.mxu0
      %v1950 = vpop.f32.mrf.mxu0
      %v1951 = vadd.f32 %v1819, %v1950
      %v1952 = vpop.f32.mrf.mxu0
      %1953 = vmatprep.mubr.bf16.mxu0 0
      %1954 = vmatmul.mubr.bf16.gmra.mxu0 %v1884
      %v1955 = vpop.f32.mrf.mxu0
      %v1956 = vadd.f32 %v1819, %v1955
      %v1957 = vpop.f32.mrf.mxu0
      %v1958 = vpop.f32.mrf.mxu0
      %v1959 = vadd.f32 %v1819, %v1958
      %v1960 = vpop.f32.mrf.mxu0
      %1961 = vmatprep.mubr.bf16.mxu0 0
      %1962 = vmatmul.mubr.bf16.gmra.mxu0 %v1887
      %v1963 = vpop.f32.mrf.mxu0
      %v1964 = vadd.f32 %v1819, %v1963
      %v1965 = vpop.f32.mrf.mxu0
      %v1966 = vpop.f32.mrf.mxu0
      %v1967 = vadd.f32 %v1819, %v1966
      %v1968 = vpop.f32.mrf.mxu0
      %1969 = vmatprep.mubr.bf16.mxu0 0
      %1970 = vmatmul.mubr.bf16.gmra.mxu0 %v1890
      %v1971 = vpop.f32.mrf.mxu0
      %v1972 = vadd.f32 %v1819, %v1971
      %v1973 = vpop.f32.mrf.mxu0
      %v1974 = vpop.f32.mrf.mxu0
      %v1975 = vadd.f32 %v1819, %v1974
      %v1976 = vpop.f32.mrf.mxu0
      %1977 = vmatprep.mubr.bf16.mxu0 0
      %1978 = vmatmul.mubr.bf16.gmra.mxu0 %v1893
      %v1979 = vpop.f32.mrf.mxu0
      %v1980 = vadd.f32 %v1819, %v1979
      %v1981 = vpop.f32.mrf.mxu0
      %v1982 = vpop.f32.mrf.mxu0
      %v1983 = vadd.f32 %v1819, %v1982
      %v1984 = vpop.f32.mrf.mxu0
      %1985 = vmatprep.mubr.bf16.mxu0 0
      %1986 = vmatmul.mubr.bf16.gmra.mxu0 %v1896
      %v1987 = vpop.f32.mrf.mxu0
      %v1988 = vadd.f32 %v1819, %v1987
      %v1989 = vpop.f32.mrf.mxu0
      %v1990 = vpop.f32.mrf.mxu0
      %v1991 = vadd.f32 %v1819, %v1990
      %v1992 = vpop.f32.mrf.mxu0
      %1993 = vmatprep.mubr.bf16.mxu0 0
      %1994 = vmatmul.mubr.bf16.gmra.mxu0 %v1899
      %v1995 = vpop.f32.mrf.mxu0
      %v1996 = vadd.f32 %v1819, %v1995
      %v1997 = vpop.f32.mrf.mxu0
      %v1998 = vpop.f32.mrf.mxu0
      %v1999 = vadd.f32 %v1819, %v1998
      %v2000 = vpop.f32.mrf.mxu0
      %2001 = vdwg.mxu0
      %vm2002 = vcmask 64512
      %2003 = vst.msk [vmem:[%s204] sm:$0xff] %vm2002, %v1940
      %2004 = vst.msk [vmem:[%s204 + $0x8] sm:$0xff] %vm2002, %v1943
      %2005 = vst.msk [vmem:[%s204 + $0x10] sm:$0xff] %vm2002, %v1948
      %2006 = vst.msk [vmem:[%s204 + $0x18] sm:$0xff] %vm2002, %v1951
      %2007 = vst.msk [vmem:[%s204 + $0x20] sm:$0xff] %vm2002, %v1956
      %2008 = vst.msk [vmem:[%s204 + $0x28] sm:$0xff] %vm2002, %v1959
      %2009 = vst.msk [vmem:[%s204 + $0x30] sm:$0xff] %vm2002, %v1964
      %2010 = vst.msk [vmem:[%s204 + $0x38] sm:$0xff] %vm2002, %v1967
      %2011 = vst.msk [vmem:[%s204 + $0x40] sm:$0xff] %vm2002, %v1972
      %2012 = vst.msk [vmem:[%s204 + $0x48] sm:$0xff] %vm2002, %v1975
      %2013 = vst.msk [vmem:[%s204 + $0x50] sm:$0xff] %vm2002, %v1980
      %2014 = vst.msk [vmem:[%s204 + $0x58] sm:$0xff] %vm2002, %v1983
      %2015 = vst.msk [vmem:[%s204 + $0x60] sm:$0xff] %vm2002, %v1988
      %2016 = vst.msk [vmem:[%s204 + $0x68] sm:$0xff] %vm2002, %v1991
      %2017 = vst.msk [vmem:[%s204 + $0x70] sm:$0xff] %vm2002, %v1996
      %2018 = vst.msk [vmem:[%s204 + $0x78] sm:$0xff] %vm2002, %v1999
      %s2019 = smul.u32 %s18, 2
      %s2020 = sadd.s32 %s2019, %s19
      %p2021 = scmp.lt.s32.totalorder %s2020, 3
      %s2022 = scalar_select %p2021, %s2020, 3
      %s2023 = smul.addr %s2022, 16
      %s2024 = smul.addr %s2023, 8
      %s2025 = scalar_lea.vmem %s3, %s2024
      // Predicated region
      $region33: #{tpu_custom_call.1} parent=31 // pred_check
        %p2026 = pneg %p120
      $region34: #{tpu_custom_call.1} parent=31 // pred_check_branch
        %2028 = sbr.rel (%p2026) target = $region36
      $region35: #{tpu_custom_call.1} parent=31 // pred_region
        %s2029 = smul.u32 %s18, 2
        %s2030 = sadd.s32 %s2029, %s19
      $region36: #{tpu_custom_call.1} parent=31 // pred_fallthru
        _
    $region32: #{tpu_custom_call.1} parent=5 // pred_fallthru
      _
    %p2031 = scmp.le.s32.totalorder 2, %s9
    // Predicated region
    $region37: #{tpu_custom_call.1} parent=5 // pred_check
      %p2032 = pneg %p2031
    $region38: #{tpu_custom_call.1} parent=5 // pred_check_branch
      %2034 = sbr.rel (%p2032) target = $region40
    $region39: #{tpu_custom_call.1} parent=5 // pred_region
      %s2035 = ssub.s32 %s9, 2
      // Predicated region
      $region41: #{tpu_custom_call.1} parent=39 // pred_check
        %p2036 = pneg %p126
      $region42: #{tpu_custom_call.1} parent=39 // pred_check_branch
        %2038 = sbr.rel (%p2036) target = $region44
      $region43: #{tpu_custom_call.1} parent=39 // pred_region
        %s2039 = smul.u32 %s20, 2
        %s2040 = sadd.s32 %s2039, %s21
        %p2041 = scmp.lt.s32.totalorder %s2040, 3
        %s2042 = scalar_select %p2041, %s2040, 3
        %s2043 = smul.addr %s2042, 16
        %s2044 = smul.addr %s2043, 8
        %s2045 = scalar_lea.vmem %s3, %s2044
      $region44: #{tpu_custom_call.1} parent=39 // pred_fallthru
        _
    $region40: #{tpu_custom_call.1} parent=5 // pred_fallthru
      _
  $region6: #{tpu_custom_call.1} parent=0 // loop_footer
    %s13 = sadd.s32 1, %s9
  $region7: #{tpu_custom_call.1} parent=0 // loop_footer_branch
    %8 = sbr.rel target = $region3
  $region8: #{tpu_custom_call.1} parent=0 // loop_exit
    _

</llo_original>
